<compile_context>
chip_gen: v6e
topology: v6e:2x2x1
jax: 0.10.0
libtpu: 0.0.40
codegen_flags: <defaults>
</compile_context>

<pallas_src>
import jax
import jax.numpy as jnp
from jax.experimental import pallas as pl
from jax.experimental.pallas import tpu as pltpu

_LANE = 128
_SUBLANE = 8


def _round_up(x, m):
    return ((x + m - 1) // m) * m


def _make_sparta_kernel(tq, lq_pad, lp_pad, p_blk):
    rows = tq * lq_pad

    def kernel(q_ref, p_ref, o_ref):
        # q_ref: (rows, Dp)            bf16  query-token embeddings (M rows of each dot)
        # p_ref: (lp_pad, Dp, p_blk)   bf16  passage slab, lp outermost, passages in lanes
        # o_ref: (tq, p_blk)           f32   per-(query, passage) scores, lane-dense

        def body(l, mx):
            # one MXU dot per passage-token position (f32 accumulation), running VPU max
            s = jnp.dot(q_ref[...], p_ref[l],
                        preferred_element_type=jnp.float32)          # (rows, p_blk) f32
            return jnp.maximum(mx, s)

        # zero init == relu fused into the max; also makes zero-padded lp tokens neutral
        mx0 = jnp.zeros((rows, p_blk), jnp.float32)
        mx = jax.lax.fori_loop(0, lp_pad, body, mx0, unroll=(lp_pad <= 32))

        t = jnp.log1p(mx)                                            # EUP, f32, mx >= 0
        t = t.reshape(tq, lq_pad, p_blk)
        o_ref[...] = jnp.sum(t, axis=1).astype(o_ref.dtype)          # sum over query tokens

    return kernel


def sparta_compute_scores(query_embeddings, passage_embeddings, *, tq=None,
                          slab_budget_bytes=12 * 1024 * 1024):
    """Pallas implementation of SPARTADocumentEncoder.compute_scores."""
    Q, Lq, D = query_embeddings.shape
    P, Lp, D2 = passage_embeddings.shape
    assert D == D2

    # ---------------- padded / tiled shapes ----------------
    # contraction dim: 256-aligned when D >= 256 (v6e/v7x MXU native), else 128
    Dp = _round_up(D, 256) if D >= 256 else _round_up(D, _LANE)
    lq_pad = _round_up(Lq, _SUBLANE)      # padded query tokens contribute log1p(0) = 0
    lp_pad = _round_up(Lp, _SUBLANE)      # padded passage tokens: dot = 0 <= relu floor
    p_pad = _round_up(P, _LANE)           # zero passages -> extra output cols, sliced off

    # queries per grid step: target rows = tq * lq_pad ~ 256 on the MXU M dim, but keep tq
    # a sublane multiple even when Q is tiny (avoids masked partial-sublane output stores).
    if tq is None:
        tq = max(1, 256 // lq_pad)
    tq = min(tq, _round_up(Q, _SUBLANE))
    tq = max(_SUBLANE, (tq // _SUBLANE) * _SUBLANE)
    q_pad = _round_up(Q, tq)
    n_qblocks = q_pad // tq

    # passage slab width (N of each dot): lane multiple, sized so one bf16 slab
    # (lp_pad * Dp * p_blk * 2 B) stays within budget -> double-buffered it still fits
    # v7x's 64 MiB VMEM (and leaves headroom on v5e/v6e).
    # TODO(synk): for very long passages (Lp * D huge) the lp axis would additionally need
    # manual DMA chunking of a single slab; not required at these shapes.
    cols_fit = max(_LANE, (slab_budget_bytes // (lp_pad * Dp * 2)) // _LANE * _LANE)
    p_blk = min(p_pad, 512, cols_fit)
    p_blk = max(_LANE, (p_blk // _LANE) * _LANE)
    p_pad = _round_up(p_pad, p_blk)
    n_pslabs = p_pad // p_blk

    # ---------------- operand layouts (done once, in XLA) ----------------
    q = jnp.pad(query_embeddings,
                ((0, q_pad - Q), (0, lq_pad - Lq), (0, Dp - D)))
    q_flat = q.reshape(q_pad * lq_pad, Dp).astype(jnp.bfloat16)          # [q_pad*lq_pad, Dp]

    p = jnp.pad(passage_embeddings,
                ((0, p_pad - P), (0, lp_pad - Lp), (0, Dp - D)))          # [p_pad, lp_pad, Dp]
    # lp outermost, contraction dim in sublanes, passages in lanes:
    p3 = jnp.transpose(p, (1, 2, 0)).astype(jnp.bfloat16)                 # [lp_pad, Dp, p_pad]

    kernel = _make_sparta_kernel(tq, lq_pad, lp_pad, p_blk)

    # honest scheduler hint (no Lp->128 padding blow-up any more)
    flops = 2 * (q_pad * lq_pad) * Dp * (p_pad * lp_pad)
    transcendentals = (q_pad * lq_pad) * p_pad
    bytes_accessed = (q_flat.size * 2) + (p3.size * 2) * n_qblocks + q_pad * p_pad * 4
    cost = pl.CostEstimate(flops=int(flops), transcendentals=int(transcendentals),
                           bytes_accessed=int(bytes_accessed))

    out = pl.pallas_call(
        kernel,
        out_shape=jax.ShapeDtypeStruct((q_pad, p_pad), jnp.float32),
        grid=(n_qblocks, n_pslabs),
        in_specs=[
            # query block: changes with i, stays resident across the inner passage-slab axis
            pl.BlockSpec((tq * lq_pad, Dp), lambda i, j: (i, 0)),
            # passage slab: streamed along j (BlockSpec double-buffering overlaps DMA / MXU)
            pl.BlockSpec((lp_pad, Dp, p_blk), lambda i, j: (0, 0, j)),
        ],
        out_specs=pl.BlockSpec((tq, p_blk), lambda i, j: (i, j)),
        compiler_params=pltpu.CompilerParams(
            dimension_semantics=("parallel", "parallel"),   # both axes shard across TCs
            vmem_limit_bytes=64 * 1024 * 1024,
        ),
        cost_estimate=cost,
    )(q_flat, p3)

    return out[:Q, :P]


def sparta_forward(word_emb, ctx_w, query_ids, passage_ids):
    """Forward pass: embedding lookups (glue, plain JAX) + Pallas scoring kernel."""
    # query_embeddings: raw word embeddings (matches bert_embeddings(input_ids))
    query_embeddings = jnp.take(word_emb, query_ids, axis=0)               # [Q, Lq, D]
    # passage_embeddings: BERT last_hidden_state stand-in
    # TODO(synk): the full BERT encoder (AutoModel.last_hidden_state) has no compact Pallas
    # equivalent here; replaced by embedding lookup + deterministic linear projection.
    passage_embeddings = jnp.take(word_emb, passage_ids, axis=0) @ ctx_w   # [P, Lp, D]
    return sparta_compute_scores(query_embeddings, passage_embeddings)


if __name__ == "__main__":
    # small shapes consistent with the module's forward
    V, D = 64, 32          # vocab size, hidden size
    Q, Lq = 2, 8           # queries, query tokens
    P, Lp = 3, 16          # passages, passage tokens

    key = jax.random.PRNGKey(0)
    k_emb, k_proj, k_qids, k_pids = jax.random.split(key, 4)

    # deterministic "parameters"
    word_emb = jax.random.normal(k_emb, (V, D), jnp.float32)           # word_embeddings.weight
    ctx_w = jax.random.normal(k_proj, (D, D), jnp.float32) * 0.2       # BERT encoder stand-in
    score_bias = jnp.array([1.0], jnp.float32)  # defined in __init__, unused in forward()

    query_ids = jax.random.randint(k_qids, (Q, Lq), 0, V)
    passage_ids = jax.random.randint(k_pids, (P, Lp), 0, V)

    scores = sparta_forward(word_emb, ctx_w, query_ids, passage_ids)
    jax.block_until_ready(scores)

    # pure-JAX f32 reference check of compute_scores semantics (kernel matmul is bf16)
    q_emb = jnp.take(word_emb, query_ids, axis=0)
    p_emb = jnp.take(word_emb, passage_ids, axis=0) @ ctx_w
    ref_tok = jnp.einsum("qld,pmd->qplm", q_emb, p_emb)                # [Q, P, Lq, Lp]
    ref = jnp.sum(jnp.log1p(jnp.maximum(jnp.max(ref_tok, axis=-1), 0.0)), axis=-1)
    assert scores.shape == (Q, P)
    assert jnp.allclose(scores, ref, atol=1e-1, rtol=3e-2), (scores, ref)

    print("KERNEL_OK")
</pallas_src>

<mosaic_0001>
module attributes {stable_mosaic.version = 11 : i64} {
  func.func @kernel(%arg0: i32, %arg1: i32, %arg2: memref<64x128xbf16, #tpu.memory_space<vmem>>, %arg3: memref<16x128x128xbf16, #tpu.memory_space<vmem>>, %arg4: memref<8x128xf32, #tpu.memory_space<vmem>>) attributes {dimension_semantics = [#tpu.dimension_semantics<parallel>, #tpu.dimension_semantics<parallel>], iteration_bounds = array<i64: 1, 1>, scalar_prefetch = 0 : i64, scratch_operands = 0 : i64, tpu.core_type = #tpu.core_type<tc>, window_params = [{transform_indices = @transform_0, window_bounds = array<i64: 64, 128>}, {transform_indices = @transform_1, window_bounds = array<i64: 16, 128, 128>}, {transform_indices = @transform_2, window_bounds = array<i64: 8, 128>}]} {
    %cst = arith.constant 0.000000e+00 : f32
    %0 = vector.broadcast %cst : f32 to vector<64x128xf32>
    %c0_i32 = arith.constant 0 : i32
    %c0 = arith.constant 0 : index
    %c0_0 = arith.constant 0 : index
    %1 = vector.load %arg2[%c0, %c0_0] : memref<64x128xbf16, #tpu.memory_space<vmem>>, vector<64x128xbf16>
    %2 = arith.index_cast %c0_i32 : i32 to index
    %c0_1 = arith.constant 0 : index
    %c0_2 = arith.constant 0 : index
    %3 = vector.load %arg3[%2, %c0_1, %c0_2] : memref<16x128x128xbf16, #tpu.memory_space<vmem>>, vector<1x128x128xbf16>
    %4 = vector.shape_cast %3 : vector<1x128x128xbf16> to vector<128x128xbf16>
    %cst_3 = arith.constant dense<0.000000e+00> : vector<64x128xf32>
    %5 = tpu.matmul %1, %4, %cst_3 {dimension_numbers = #tpu.dot_dimension_numbers<[1], [0], [0], [1], [0, 0, 1, 1], [], []>} : vector<64x128xbf16>, vector<128x128xbf16>, vector<64x128xf32> -> vector<64x128xf32>
    %6 = arith.maximumf %0, %5 : vector<64x128xf32>
    %c1_i32 = arith.constant 1 : i32
    %c0_4 = arith.constant 0 : index
    %c0_5 = arith.constant 0 : index
    %7 = vector.load %arg2[%c0_4, %c0_5] : memref<64x128xbf16, #tpu.memory_space<vmem>>, vector<64x128xbf16>
    %8 = arith.index_cast %c1_i32 : i32 to index
    %c0_6 = arith.constant 0 : index
    %c0_7 = arith.constant 0 : index
    %9 = vector.load %arg3[%8, %c0_6, %c0_7] : memref<16x128x128xbf16, #tpu.memory_space<vmem>>, vector<1x128x128xbf16>
    %10 = vector.shape_cast %9 : vector<1x128x128xbf16> to vector<128x128xbf16>
    %cst_8 = arith.constant dense<0.000000e+00> : vector<64x128xf32>
    %11 = tpu.matmul %7, %10, %cst_8 {dimension_numbers = #tpu.dot_dimension_numbers<[1], [0], [0], [1], [0, 0, 1, 1], [], []>} : vector<64x128xbf16>, vector<128x128xbf16>, vector<64x128xf32> -> vector<64x128xf32>
    %12 = arith.maximumf %6, %11 : vector<64x128xf32>
    %c2_i32 = arith.constant 2 : i32
    %c0_9 = arith.constant 0 : index
    %c0_10 = arith.constant 0 : index
    %13 = vector.load %arg2[%c0_9, %c0_10] : memref<64x128xbf16, #tpu.memory_space<vmem>>, vector<64x128xbf16>
    %14 = arith.index_cast %c2_i32 : i32 to index
    %c0_11 = arith.constant 0 : index
    %c0_12 = arith.constant 0 : index
    %15 = vector.load %arg3[%14, %c0_11, %c0_12] : memref<16x128x128xbf16, #tpu.memory_space<vmem>>, vector<1x128x128xbf16>
    %16 = vector.shape_cast %15 : vector<1x128x128xbf16> to vector<128x128xbf16>
    %cst_13 = arith.constant dense<0.000000e+00> : vector<64x128xf32>
    %17 = tpu.matmul %13, %16, %cst_13 {dimension_numbers = #tpu.dot_dimension_numbers<[1], [0], [0], [1], [0, 0, 1, 1], [], []>} : vector<64x128xbf16>, vector<128x128xbf16>, vector<64x128xf32> -> vector<64x128xf32>
    %18 = arith.maximumf %12, %17 : vector<64x128xf32>
    %c3_i32 = arith.constant 3 : i32
    %c0_14 = arith.constant 0 : index
    %c0_15 = arith.constant 0 : index
    %19 = vector.load %arg2[%c0_14, %c0_15] : memref<64x128xbf16, #tpu.memory_space<vmem>>, vector<64x128xbf16>
    %20 = arith.index_cast %c3_i32 : i32 to index
    %c0_16 = arith.constant 0 : index
    %c0_17 = arith.constant 0 : index
    %21 = vector.load %arg3[%20, %c0_16, %c0_17] : memref<16x128x128xbf16, #tpu.memory_space<vmem>>, vector<1x128x128xbf16>
    %22 = vector.shape_cast %21 : vector<1x128x128xbf16> to vector<128x128xbf16>
    %cst_18 = arith.constant dense<0.000000e+00> : vector<64x128xf32>
    %23 = tpu.matmul %19, %22, %cst_18 {dimension_numbers = #tpu.dot_dimension_numbers<[1], [0], [0], [1], [0, 0, 1, 1], [], []>} : vector<64x128xbf16>, vector<128x128xbf16>, vector<64x128xf32> -> vector<64x128xf32>
    %24 = arith.maximumf %18, %23 : vector<64x128xf32>
    %c4_i32 = arith.constant 4 : i32
    %c0_19 = arith.constant 0 : index
    %c0_20 = arith.constant 0 : index
    %25 = vector.load %arg2[%c0_19, %c0_20] : memref<64x128xbf16, #tpu.memory_space<vmem>>, vector<64x128xbf16>
    %26 = arith.index_cast %c4_i32 : i32 to index
    %c0_21 = arith.constant 0 : index
    %c0_22 = arith.constant 0 : index
    %27 = vector.load %arg3[%26, %c0_21, %c0_22] : memref<16x128x128xbf16, #tpu.memory_space<vmem>>, vector<1x128x128xbf16>
    %28 = vector.shape_cast %27 : vector<1x128x128xbf16> to vector<128x128xbf16>
    %cst_23 = arith.constant dense<0.000000e+00> : vector<64x128xf32>
    %29 = tpu.matmul %25, %28, %cst_23 {dimension_numbers = #tpu.dot_dimension_numbers<[1], [0], [0], [1], [0, 0, 1, 1], [], []>} : vector<64x128xbf16>, vector<128x128xbf16>, vector<64x128xf32> -> vector<64x128xf32>
    %30 = arith.maximumf %24, %29 : vector<64x128xf32>
    %c5_i32 = arith.constant 5 : i32
    %c0_24 = arith.constant 0 : index
    %c0_25 = arith.constant 0 : index
    %31 = vector.load %arg2[%c0_24, %c0_25] : memref<64x128xbf16, #tpu.memory_space<vmem>>, vector<64x128xbf16>
    %32 = arith.index_cast %c5_i32 : i32 to index
    %c0_26 = arith.constant 0 : index
    %c0_27 = arith.constant 0 : index
    %33 = vector.load %arg3[%32, %c0_26, %c0_27] : memref<16x128x128xbf16, #tpu.memory_space<vmem>>, vector<1x128x128xbf16>
    %34 = vector.shape_cast %33 : vector<1x128x128xbf16> to vector<128x128xbf16>
    %cst_28 = arith.constant dense<0.000000e+00> : vector<64x128xf32>
    %35 = tpu.matmul %31, %34, %cst_28 {dimension_numbers = #tpu.dot_dimension_numbers<[1], [0], [0], [1], [0, 0, 1, 1], [], []>} : vector<64x128xbf16>, vector<128x128xbf16>, vector<64x128xf32> -> vector<64x128xf32>
    %36 = arith.maximumf %30, %35 : vector<64x128xf32>
    %c6_i32 = arith.constant 6 : i32
    %c0_29 = arith.constant 0 : index
    %c0_30 = arith.constant 0 : index
    %37 = vector.load %arg2[%c0_29, %c0_30] : memref<64x128xbf16, #tpu.memory_space<vmem>>, vector<64x128xbf16>
    %38 = arith.index_cast %c6_i32 : i32 to index
    %c0_31 = arith.constant 0 : index
    %c0_32 = arith.constant 0 : index
    %39 = vector.load %arg3[%38, %c0_31, %c0_32] : memref<16x128x128xbf16, #tpu.memory_space<vmem>>, vector<1x128x128xbf16>
    %40 = vector.shape_cast %39 : vector<1x128x128xbf16> to vector<128x128xbf16>
    %cst_33 = arith.constant dense<0.000000e+00> : vector<64x128xf32>
    %41 = tpu.matmul %37, %40, %cst_33 {dimension_numbers = #tpu.dot_dimension_numbers<[1], [0], [0], [1], [0, 0, 1, 1], [], []>} : vector<64x128xbf16>, vector<128x128xbf16>, vector<64x128xf32> -> vector<64x128xf32>
    %42 = arith.maximumf %36, %41 : vector<64x128xf32>
    %c7_i32 = arith.constant 7 : i32
    %c0_34 = arith.constant 0 : index
    %c0_35 = arith.constant 0 : index
    %43 = vector.load %arg2[%c0_34, %c0_35] : memref<64x128xbf16, #tpu.memory_space<vmem>>, vector<64x128xbf16>
    %44 = arith.index_cast %c7_i32 : i32 to index
    %c0_36 = arith.constant 0 : index
    %c0_37 = arith.constant 0 : index
    %45 = vector.load %arg3[%44, %c0_36, %c0_37] : memref<16x128x128xbf16, #tpu.memory_space<vmem>>, vector<1x128x128xbf16>
    %46 = vector.shape_cast %45 : vector<1x128x128xbf16> to vector<128x128xbf16>
    %cst_38 = arith.constant dense<0.000000e+00> : vector<64x128xf32>
    %47 = tpu.matmul %43, %46, %cst_38 {dimension_numbers = #tpu.dot_dimension_numbers<[1], [0], [0], [1], [0, 0, 1, 1], [], []>} : vector<64x128xbf16>, vector<128x128xbf16>, vector<64x128xf32> -> vector<64x128xf32>
    %48 = arith.maximumf %42, %47 : vector<64x128xf32>
    %c8_i32 = arith.constant 8 : i32
    %c0_39 = arith.constant 0 : index
    %c0_40 = arith.constant 0 : index
    %49 = vector.load %arg2[%c0_39, %c0_40] : memref<64x128xbf16, #tpu.memory_space<vmem>>, vector<64x128xbf16>
    %50 = arith.index_cast %c8_i32 : i32 to index
    %c0_41 = arith.constant 0 : index
    %c0_42 = arith.constant 0 : index
    %51 = vector.load %arg3[%50, %c0_41, %c0_42] : memref<16x128x128xbf16, #tpu.memory_space<vmem>>, vector<1x128x128xbf16>
    %52 = vector.shape_cast %51 : vector<1x128x128xbf16> to vector<128x128xbf16>
    %cst_43 = arith.constant dense<0.000000e+00> : vector<64x128xf32>
    %53 = tpu.matmul %49, %52, %cst_43 {dimension_numbers = #tpu.dot_dimension_numbers<[1], [0], [0], [1], [0, 0, 1, 1], [], []>} : vector<64x128xbf16>, vector<128x128xbf16>, vector<64x128xf32> -> vector<64x128xf32>
    %54 = arith.maximumf %48, %53 : vector<64x128xf32>
    %c9_i32 = arith.constant 9 : i32
    %c0_44 = arith.constant 0 : index
    %c0_45 = arith.constant 0 : index
    %55 = vector.load %arg2[%c0_44, %c0_45] : memref<64x128xbf16, #tpu.memory_space<vmem>>, vector<64x128xbf16>
    %56 = arith.index_cast %c9_i32 : i32 to index
    %c0_46 = arith.constant 0 : index
    %c0_47 = arith.constant 0 : index
    %57 = vector.load %arg3[%56, %c0_46, %c0_47] : memref<16x128x128xbf16, #tpu.memory_space<vmem>>, vector<1x128x128xbf16>
    %58 = vector.shape_cast %57 : vector<1x128x128xbf16> to vector<128x128xbf16>
    %cst_48 = arith.constant dense<0.000000e+00> : vector<64x128xf32>
    %59 = tpu.matmul %55, %58, %cst_48 {dimension_numbers = #tpu.dot_dimension_numbers<[1], [0], [0], [1], [0, 0, 1, 1], [], []>} : vector<64x128xbf16>, vector<128x128xbf16>, vector<64x128xf32> -> vector<64x128xf32>
    %60 = arith.maximumf %54, %59 : vector<64x128xf32>
    %c10_i32 = arith.constant 10 : i32
    %c0_49 = arith.constant 0 : index
    %c0_50 = arith.constant 0 : index
    %61 = vector.load %arg2[%c0_49, %c0_50] : memref<64x128xbf16, #tpu.memory_space<vmem>>, vector<64x128xbf16>
    %62 = arith.index_cast %c10_i32 : i32 to index
    %c0_51 = arith.constant 0 : index
    %c0_52 = arith.constant 0 : index
    %63 = vector.load %arg3[%62, %c0_51, %c0_52] : memref<16x128x128xbf16, #tpu.memory_space<vmem>>, vector<1x128x128xbf16>
    %64 = vector.shape_cast %63 : vector<1x128x128xbf16> to vector<128x128xbf16>
    %cst_53 = arith.constant dense<0.000000e+00> : vector<64x128xf32>
    %65 = tpu.matmul %61, %64, %cst_53 {dimension_numbers = #tpu.dot_dimension_numbers<[1], [0], [0], [1], [0, 0, 1, 1], [], []>} : vector<64x128xbf16>, vector<128x128xbf16>, vector<64x128xf32> -> vector<64x128xf32>
    %66 = arith.maximumf %60, %65 : vector<64x128xf32>
    %c11_i32 = arith.constant 11 : i32
    %c0_54 = arith.constant 0 : index
    %c0_55 = arith.constant 0 : index
    %67 = vector.load %arg2[%c0_54, %c0_55] : memref<64x128xbf16, #tpu.memory_space<vmem>>, vector<64x128xbf16>
    %68 = arith.index_cast %c11_i32 : i32 to index
    %c0_56 = arith.constant 0 : index
    %c0_57 = arith.constant 0 : index
    %69 = vector.load %arg3[%68, %c0_56, %c0_57] : memref<16x128x128xbf16, #tpu.memory_space<vmem>>, vector<1x128x128xbf16>
    %70 = vector.shape_cast %69 : vector<1x128x128xbf16> to vector<128x128xbf16>
    %cst_58 = arith.constant dense<0.000000e+00> : vector<64x128xf32>
    %71 = tpu.matmul %67, %70, %cst_58 {dimension_numbers = #tpu.dot_dimension_numbers<[1], [0], [0], [1], [0, 0, 1, 1], [], []>} : vector<64x128xbf16>, vector<128x128xbf16>, vector<64x128xf32> -> vector<64x128xf32>
    %72 = arith.maximumf %66, %71 : vector<64x128xf32>
    %c12_i32 = arith.constant 12 : i32
    %c0_59 = arith.constant 0 : index
    %c0_60 = arith.constant 0 : index
    %73 = vector.load %arg2[%c0_59, %c0_60] : memref<64x128xbf16, #tpu.memory_space<vmem>>, vector<64x128xbf16>
    %74 = arith.index_cast %c12_i32 : i32 to index
    %c0_61 = arith.constant 0 : index
    %c0_62 = arith.constant 0 : index
    %75 = vector.load %arg3[%74, %c0_61, %c0_62] : memref<16x128x128xbf16, #tpu.memory_space<vmem>>, vector<1x128x128xbf16>
    %76 = vector.shape_cast %75 : vector<1x128x128xbf16> to vector<128x128xbf16>
    %cst_63 = arith.constant dense<0.000000e+00> : vector<64x128xf32>
    %77 = tpu.matmul %73, %76, %cst_63 {dimension_numbers = #tpu.dot_dimension_numbers<[1], [0], [0], [1], [0, 0, 1, 1], [], []>} : vector<64x128xbf16>, vector<128x128xbf16>, vector<64x128xf32> -> vector<64x128xf32>
    %78 = arith.maximumf %72, %77 : vector<64x128xf32>
    %c13_i32 = arith.constant 13 : i32
    %c0_64 = arith.constant 0 : index
    %c0_65 = arith.constant 0 : index
    %79 = vector.load %arg2[%c0_64, %c0_65] : memref<64x128xbf16, #tpu.memory_space<vmem>>, vector<64x128xbf16>
    %80 = arith.index_cast %c13_i32 : i32 to index
    %c0_66 = arith.constant 0 : index
    %c0_67 = arith.constant 0 : index
    %81 = vector.load %arg3[%80, %c0_66, %c0_67] : memref<16x128x128xbf16, #tpu.memory_space<vmem>>, vector<1x128x128xbf16>
    %82 = vector.shape_cast %81 : vector<1x128x128xbf16> to vector<128x128xbf16>
    %cst_68 = arith.constant dense<0.000000e+00> : vector<64x128xf32>
    %83 = tpu.matmul %79, %82, %cst_68 {dimension_numbers = #tpu.dot_dimension_numbers<[1], [0], [0], [1], [0, 0, 1, 1], [], []>} : vector<64x128xbf16>, vector<128x128xbf16>, vector<64x128xf32> -> vector<64x128xf32>
    %84 = arith.maximumf %78, %83 : vector<64x128xf32>
    %c14_i32 = arith.constant 14 : i32
    %c0_69 = arith.constant 0 : index
    %c0_70 = arith.constant 0 : index
    %85 = vector.load %arg2[%c0_69, %c0_70] : memref<64x128xbf16, #tpu.memory_space<vmem>>, vector<64x128xbf16>
    %86 = arith.index_cast %c14_i32 : i32 to index
    %c0_71 = arith.constant 0 : index
    %c0_72 = arith.constant 0 : index
    %87 = vector.load %arg3[%86, %c0_71, %c0_72] : memref<16x128x128xbf16, #tpu.memory_space<vmem>>, vector<1x128x128xbf16>
    %88 = vector.shape_cast %87 : vector<1x128x128xbf16> to vector<128x128xbf16>
    %cst_73 = arith.constant dense<0.000000e+00> : vector<64x128xf32>
    %89 = tpu.matmul %85, %88, %cst_73 {dimension_numbers = #tpu.dot_dimension_numbers<[1], [0], [0], [1], [0, 0, 1, 1], [], []>} : vector<64x128xbf16>, vector<128x128xbf16>, vector<64x128xf32> -> vector<64x128xf32>
    %90 = arith.maximumf %84, %89 : vector<64x128xf32>
    %c15_i32 = arith.constant 15 : i32
    %c0_74 = arith.constant 0 : index
    %c0_75 = arith.constant 0 : index
    %91 = vector.load %arg2[%c0_74, %c0_75] : memref<64x128xbf16, #tpu.memory_space<vmem>>, vector<64x128xbf16>
    %92 = arith.index_cast %c15_i32 : i32 to index
    %c0_76 = arith.constant 0 : index
    %c0_77 = arith.constant 0 : index
    %93 = vector.load %arg3[%92, %c0_76, %c0_77] : memref<16x128x128xbf16, #tpu.memory_space<vmem>>, vector<1x128x128xbf16>
    %94 = vector.shape_cast %93 : vector<1x128x128xbf16> to vector<128x128xbf16>
    %cst_78 = arith.constant dense<0.000000e+00> : vector<64x128xf32>
    %95 = tpu.matmul %91, %94, %cst_78 {dimension_numbers = #tpu.dot_dimension_numbers<[1], [0], [0], [1], [0, 0, 1, 1], [], []>} : vector<64x128xbf16>, vector<128x128xbf16>, vector<64x128xf32> -> vector<64x128xf32>
    %96 = arith.maximumf %90, %95 : vector<64x128xf32>
    %c16_i32 = arith.constant 16 : i32
    %97 = math.log1p %96 : vector<64x128xf32>
    %98 = vector.shape_cast %97 : vector<64x128xf32> to vector<8x8x128xf32>
    %cst_79 = arith.constant dense<0.000000e+00> : vector<8x128xf32>
    %99 = vector.multi_reduction <add>, %98, %cst_79 [1] : vector<8x8x128xf32> to vector<8x128xf32>
    %c0_80 = arith.constant 0 : index
    %c0_81 = arith.constant 0 : index
    %100 = vector.load %arg4[%c0_80, %c0_81] : memref<8x128xf32, #tpu.memory_space<vmem>>, vector<8x128xf32>
    tpu.vector_store %arg4[%c0_80, %c0_81], %99 {strides = array<i32>} : memref<8x128xf32, #tpu.memory_space<vmem>>, vector<8x128xf32>,
    return
  }
  func.func @transform_0(%arg0: i32, %arg1: i32) -> (i32, i32) {
    %c0_i32 = arith.constant 0 : i32
    %c0_i32_0 = arith.constant 0 : i32
    return %arg0, %c0_i32 : i32, i32
  }
  func.func @transform_1(%arg0: i32, %arg1: i32) -> (i32, i32, i32) {
    %c0_i32 = arith.constant 0 : i32
    %c0_i32_0 = arith.constant 0 : i32
    %c0_i32_1 = arith.constant 0 : i32
    return %c0_i32, %c0_i32_0, %arg1 : i32, i32, i32
  }
  func.func @transform_2(%arg0: i32, %arg1: i32) -> (i32, i32) {
    %c0_i32 = arith.constant 0 : i32
    return %arg0, %arg1 : i32, i32
  }
}

</mosaic_0001>

<llo_original>
// kernel: tpu_custom_call.1
$region0: #{tpu_custom_call.1}
  #allocation0 [shape = 'u32[]', space=smem, size = 0x4, offset = 0x4, fixed_abs, tag = 'smem constant byte address 0x4 - core index']
  #allocation1 [shape = 'u32[144,128]{1,0:T(1,128)}', space=vmem, size = 0x12000, scoped, tag = 'internal scratch']
  %s0 = inlined_call_operand.hbm [shape: bf16[64,128], index: 0, kind: input, shape index: {}]
  %s1 = inlined_call_operand.hbm [shape: bf16[16,128,128], index: 1, kind: input, shape index: {}]
  %s2 = inlined_call_operand.hbm [shape: f32[8,128], index: 2, kind: output, shape index: {}]
  %s3 = sld [smem:[#allocation0]]
  $region26: #{tpu_custom_call.1} parent=0
    _
  %s5 = ssub.s32 1, %s3
  %s6 = scalar_select 0, %s5, %s3
  $region1: #{tpu_custom_call.1} parent=0
    #allocation2 [shape = 'u8[16384]{0}', space=vmem, size = 0x4000, scoped, tag = 'input window, operand 0, single buffered']
    #allocation3 [shape = 's32[1]{0}', space=sflag, size = 0x4, scoped, tag = 'scoped memory for tpu_custom_call.1']
    #allocation4 [shape = 's32[1]{0}', space=sflag, size = 0x4, scoped, tag = 'scoped memory for tpu_custom_call.1']
    #allocation5 [shape = 'u8[524288]{0}', space=vmem, size = 0x80000, scoped, tag = 'input window, operand 1, single buffered']
    #allocation6 [shape = 's32[1]{0}', space=sflag, size = 0x4, scoped, tag = 'scoped memory for tpu_custom_call.1']
    #allocation7 [shape = 'u8[4096]{0}', space=vmem, size = 0x1000, scoped, tag = 'output window, operand 0, single buffered']
    %7 = vsyncpa [#allocation3], 0
    %8 = vsyncpa [#allocation6], 0
    %9 = vsyncpa [#allocation4], 0
    // Predicated region
    $region2: #{tpu_custom_call.1} parent=1 // pred_check
      _
    $region3: #{tpu_custom_call.1} parent=1 // pred_check_branch
      %11 = sbr.rel (0) target = $region5
    $region4: #{tpu_custom_call.1} parent=1 // pred_region
      %s13 = ssub.s32 512, 512
      %14 = vsyncadd [#allocation3], %s13
      %s15 = sshll.u32 [#allocation2], 4
      %s16 = int_to_ptr.vmem [resolvable:$true] %s15
      %21 = dma.hbm_to_vmem [thread:$0]  %s0, 512, %s16, [#allocation3], 64, 64, 4
    $region5: #{tpu_custom_call.1} parent=1 // pred_fallthru
      _
    // Predicated region
    $region6: #{tpu_custom_call.1} parent=1 // pred_check
      _
    $region7: #{tpu_custom_call.1} parent=1 // pred_check_branch
      %23 = sbr.rel (0) target = $region9
    $region8: #{tpu_custom_call.1} parent=1 // pred_region
      %s25 = ssub.s32 16384, 16384
      %26 = vsyncadd [#allocation6], %s25
      %s27 = sshll.u32 [#allocation5], 4
      %s28 = int_to_ptr.vmem [resolvable:$true] %s27
      %33 = dma.hbm_to_vmem [thread:$0]  %s1, 16384, %s28, [#allocation6], 64, 64, 4
    $region9: #{tpu_custom_call.1} parent=1 // pred_fallthru
      _
    // Predicated region
    $region10: #{tpu_custom_call.1} parent=1 // pred_check
      _
    $region11: #{tpu_custom_call.1} parent=1 // pred_check_branch
      %35 = sbr.rel (0) target = $region13
    $region12: #{tpu_custom_call.1} parent=1 // pred_region
      %36 = dma.done [#allocation3], 512
    $region13: #{tpu_custom_call.1} parent=1 // pred_fallthru
      _
    // Predicated region
    $region14: #{tpu_custom_call.1} parent=1 // pred_check
      _
    $region15: #{tpu_custom_call.1} parent=1 // pred_check_branch
      %38 = sbr.rel (0) target = $region17
    $region16: #{tpu_custom_call.1} parent=1 // pred_region
      %39 = dma.done [#allocation6], 16384
    $region17: #{tpu_custom_call.1} parent=1 // pred_fallthru
      _
    %v41 = vld [vmem:[#allocation2] sm:$0xf]
    %v42 = vld [vmem:[#allocation2 + $0x4] sm:$0xf]
    %v43 = vld [vmem:[#allocation2 + $0x8] sm:$0xf]
    %v44 = vld [vmem:[#allocation2 + $0xc] sm:$0xf]
    %v45 = vld [vmem:[#allocation2 + $0x10] sm:$0xf]
    %v46 = vld [vmem:[#allocation2 + $0x14] sm:$0xf]
    %v47 = vld [vmem:[#allocation2 + $0x18] sm:$0xf]
    %v48 = vld [vmem:[#allocation2 + $0x1c] sm:$0xf]
    %v49 = vld [vmem:[#allocation5] sm:$0xf]
    %v50 = vld [vmem:[#allocation5 + $0x4] sm:$0xf]
    %v51 = vld [vmem:[#allocation5 + $0x8] sm:$0xf]
    %v52 = vld [vmem:[#allocation5 + $0xc] sm:$0xf]
    %v53 = vld [vmem:[#allocation5 + $0x10] sm:$0xf]
    %v54 = vld [vmem:[#allocation5 + $0x14] sm:$0xf]
    %v55 = vld [vmem:[#allocation5 + $0x18] sm:$0xf]
    %v56 = vld [vmem:[#allocation5 + $0x1c] sm:$0xf]
    %v57 = vld [vmem:[#allocation5 + $0x20] sm:$0xf]
    %v58 = vld [vmem:[#allocation5 + $0x24] sm:$0xf]
    %v59 = vld [vmem:[#allocation5 + $0x28] sm:$0xf]
    %v60 = vld [vmem:[#allocation5 + $0x2c] sm:$0xf]
    %v61 = vld [vmem:[#allocation5 + $0x30] sm:$0xf]
    %v62 = vld [vmem:[#allocation5 + $0x34] sm:$0xf]
    %v63 = vld [vmem:[#allocation5 + $0x38] sm:$0xf]
    %v64 = vld [vmem:[#allocation5 + $0x3c] sm:$0xf]
    %v73 = vunpack.c.l.b16 %v41
    %v74 = vunpack.c.l.b16 %v42
    %v75 = vunpack.c.l.b16 %v43
    %v76 = vunpack.c.l.b16 %v44
    %v77 = vunpack.c.l.b16 %v45
    %v78 = vunpack.c.l.b16 %v46
    %v79 = vunpack.c.l.b16 %v47
    %v80 = vunpack.c.l.b16 %v48
    %v81 = vpack.c.b16 %v74, %v73
    %v82 = vpack.c.b16 %v76, %v75
    %v83 = vpack.c.b16 %v78, %v77
    %v84 = vpack.c.b16 %v80, %v79
    %v105 = vunpack.c.l.b16 %v49
    %v106 = vunpack.c.l.b16 %v50
    %v107 = vunpack.c.l.b16 %v51
    %v108 = vunpack.c.l.b16 %v52
    %v109 = vunpack.c.l.b16 %v53
    %v110 = vunpack.c.l.b16 %v54
    %v111 = vunpack.c.l.b16 %v55
    %v112 = vunpack.c.l.b16 %v56
    %v113 = vunpack.c.l.b16 %v57
    %v114 = vunpack.c.l.b16 %v58
    %v115 = vunpack.c.l.b16 %v59
    %v116 = vunpack.c.l.b16 %v60
    %v117 = vunpack.c.l.b16 %v61
    %v118 = vunpack.c.l.b16 %v62
    %v119 = vunpack.c.l.b16 %v63
    %v120 = vunpack.c.l.b16 %v64
    %v121 = vpack.c.b16 %v106, %v105
    %v122 = vpack.c.b16 %v108, %v107
    %v123 = vpack.c.b16 %v110, %v109
    %v124 = vpack.c.b16 %v112, %v111
    %v125 = vpack.c.b16 %v114, %v113
    %v126 = vpack.c.b16 %v116, %v115
    %v127 = vpack.c.b16 %v118, %v117
    %v128 = vpack.c.b16 %v120, %v119
    %137 = vmatprep.subr.bf16.mxu0 0
    %138 = vmatpush1.bf16.msra.mxu0 %v128
    %139 = vmatprep.subr.bf16.mxu0 0
    %140 = vmatpush1.bf16.msra.mxu0 %v127
    %141 = vmatprep.subr.bf16.mxu0 0
    %142 = vmatpush1.bf16.msra.mxu0 %v126
    %143 = vmatprep.subr.bf16.mxu0 0
    %144 = vmatpush1.bf16.msra.mxu0 %v125
    %145 = vmatprep.subr.bf16.mxu0 0
    %146 = vmatpush1.bf16.msra.mxu0 %v124
    %147 = vmatprep.subr.bf16.mxu0 0
    %148 = vmatpush1.bf16.msra.mxu0 %v123
    %149 = vmatprep.subr.bf16.mxu0 0
    %150 = vmatpush1.bf16.msra.mxu0 %v122
    %151 = vmatprep.subr.bf16.mxu0 0
    %152 = vmatpush1.bf16.msra.mxu0 %v121
    %153 = vmatprep.subr.bf16.mxu0 0
    %154 = vmatpush2.bf16.msra.mxu0 0
    %155 = vmatprep.subr.bf16.mxu0 0
    %156 = vmatpush2.bf16.msra.mxu0 0
    %157 = vmatprep.subr.bf16.mxu0 0
    %158 = vmatpush2.bf16.msra.mxu0 0
    %159 = vmatprep.subr.bf16.mxu0 0
    %160 = vmatpush2.bf16.msra.mxu0 0
    %161 = vmatprep.subr.bf16.mxu0 0
    %162 = vmatpush2.bf16.msra.mxu0 0
    %163 = vmatprep.subr.bf16.mxu0 0
    %164 = vmatpush2.bf16.msra.mxu0 0
    %165 = vmatprep.subr.bf16.mxu0 0
    %166 = vmatpush2.bf16.msra.mxu0 0
    %167 = vmatprep.subr.bf16.mxu0 0
    %168 = vmatpush2.bf16.msra.mxu0 0
    %169 = vmatprep.mubr.bf16.mxu0 0
    %170 = vmatmul.mubr.bf16.gmra.mxu0 %v81
    %v171 = vpop.f32.mrf.mxu0
    %v172 = vadd.f32 0.0, %v171
    %v173 = vpop.f32.mrf.mxu0
    %v174 = vpop.f32.mrf.mxu0
    %v175 = vadd.f32 0.0, %v174
    %v176 = vpop.f32.mrf.mxu0
    %177 = vmatprep.mubr.bf16.mxu0 0
    %178 = vmatmul.mubr.bf16.gmra.mxu0 %v82
    %v179 = vpop.f32.mrf.mxu0
    %v180 = vadd.f32 0.0, %v179
    %v181 = vpop.f32.mrf.mxu0
    %v182 = vpop.f32.mrf.mxu0
    %v183 = vadd.f32 0.0, %v182
    %v184 = vpop.f32.mrf.mxu0
    %185 = vmatprep.mubr.bf16.mxu0 0
    %186 = vmatmul.mubr.bf16.gmra.mxu0 %v83
    %v187 = vpop.f32.mrf.mxu0
    %v188 = vadd.f32 0.0, %v187
    %v189 = vpop.f32.mrf.mxu0
    %v190 = vpop.f32.mrf.mxu0
    %v191 = vadd.f32 0.0, %v190
    %v192 = vpop.f32.mrf.mxu0
    %193 = vmatprep.mubr.bf16.mxu0 0
    %194 = vmatmul.mubr.bf16.gmra.mxu0 %v84
    %v195 = vpop.f32.mrf.mxu0
    %v196 = vadd.f32 0.0, %v195
    %v197 = vpop.f32.mrf.mxu0
    %v198 = vpop.f32.mrf.mxu0
    %v199 = vadd.f32 0.0, %v198
    %v200 = vpop.f32.mrf.mxu0
    %201 = vdwg.mxu0
    %v202 = vmax.f32 %v172, 0.0
    %v203 = vmax.f32 %v175, 0.0
    %v204 = vmax.f32 %v180, 0.0
    %v205 = vmax.f32 %v183, 0.0
    %v206 = vmax.f32 %v188, 0.0
    %v207 = vmax.f32 %v191, 0.0
    %v208 = vmax.f32 %v196, 0.0
    %v209 = vmax.f32 %v199, 0.0
    %s210 = scalar_lea.vmem [#allocation5], 64
    %v211 = vld [vmem:[%s210] sm:$0xf]
    %v212 = vld [vmem:[%s210 + $0x4] sm:$0xf]
    %v213 = vld [vmem:[%s210 + $0x8] sm:$0xf]
    %v214 = vld [vmem:[%s210 + $0xc] sm:$0xf]
    %v215 = vld [vmem:[%s210 + $0x10] sm:$0xf]
    %v216 = vld [vmem:[%s210 + $0x14] sm:$0xf]
    %v217 = vld [vmem:[%s210 + $0x18] sm:$0xf]
    %v218 = vld [vmem:[%s210 + $0x1c] sm:$0xf]
    %v219 = vld [vmem:[%s210 + $0x20] sm:$0xf]
    %v220 = vld [vmem:[%s210 + $0x24] sm:$0xf]
    %v221 = vld [vmem:[%s210 + $0x28] sm:$0xf]
    %v222 = vld [vmem:[%s210 + $0x2c] sm:$0xf]
    %v223 = vld [vmem:[%s210 + $0x30] sm:$0xf]
    %v224 = vld [vmem:[%s210 + $0x34] sm:$0xf]
    %v225 = vld [vmem:[%s210 + $0x38] sm:$0xf]
    %v226 = vld [vmem:[%s210 + $0x3c] sm:$0xf]
    %v243 = vunpack.c.l.b16 %v211
    %v244 = vunpack.c.l.b16 %v212
    %v245 = vunpack.c.l.b16 %v213
    %v246 = vunpack.c.l.b16 %v214
    %v247 = vunpack.c.l.b16 %v215
    %v248 = vunpack.c.l.b16 %v216
    %v249 = vunpack.c.l.b16 %v217
    %v250 = vunpack.c.l.b16 %v218
    %v251 = vunpack.c.l.b16 %v219
    %v252 = vunpack.c.l.b16 %v220
    %v253 = vunpack.c.l.b16 %v221
    %v254 = vunpack.c.l.b16 %v222
    %v255 = vunpack.c.l.b16 %v223
    %v256 = vunpack.c.l.b16 %v224
    %v257 = vunpack.c.l.b16 %v225
    %v258 = vunpack.c.l.b16 %v226
    %v259 = vpack.c.b16 %v244, %v243
    %v260 = vpack.c.b16 %v246, %v245
    %v261 = vpack.c.b16 %v248, %v247
    %v262 = vpack.c.b16 %v250, %v249
    %v263 = vpack.c.b16 %v252, %v251
    %v264 = vpack.c.b16 %v254, %v253
    %v265 = vpack.c.b16 %v256, %v255
    %v266 = vpack.c.b16 %v258, %v257
    %275 = vmatprep.subr.bf16.mxu0 0
    %276 = vmatpush1.bf16.msra.mxu0 %v266
    %277 = vmatprep.subr.bf16.mxu0 0
    %278 = vmatpush1.bf16.msra.mxu0 %v265
    %279 = vmatprep.subr.bf16.mxu0 0
    %280 = vmatpush1.bf16.msra.mxu0 %v264
    %281 = vmatprep.subr.bf16.mxu0 0
    %282 = vmatpush1.bf16.msra.mxu0 %v263
    %283 = vmatprep.subr.bf16.mxu0 0
    %284 = vmatpush1.bf16.msra.mxu0 %v262
    %285 = vmatprep.subr.bf16.mxu0 0
    %286 = vmatpush1.bf16.msra.mxu0 %v261
    %287 = vmatprep.subr.bf16.mxu0 0
    %288 = vmatpush1.bf16.msra.mxu0 %v260
    %289 = vmatprep.subr.bf16.mxu0 0
    %290 = vmatpush1.bf16.msra.mxu0 %v259
    %291 = vmatprep.subr.bf16.mxu0 0
    %292 = vmatpush2.bf16.msra.mxu0 0
    %293 = vmatprep.subr.bf16.mxu0 0
    %294 = vmatpush2.bf16.msra.mxu0 0
    %295 = vmatprep.subr.bf16.mxu0 0
    %296 = vmatpush2.bf16.msra.mxu0 0
    %297 = vmatprep.subr.bf16.mxu0 0
    %298 = vmatpush2.bf16.msra.mxu0 0
    %299 = vmatprep.subr.bf16.mxu0 0
    %300 = vmatpush2.bf16.msra.mxu0 0
    %301 = vmatprep.subr.bf16.mxu0 0
    %302 = vmatpush2.bf16.msra.mxu0 0
    %303 = vmatprep.subr.bf16.mxu0 0
    %304 = vmatpush2.bf16.msra.mxu0 0
    %305 = vmatprep.subr.bf16.mxu0 0
    %306 = vmatpush2.bf16.msra.mxu0 0
    %307 = vmatprep.mubr.bf16.mxu0 0
    %308 = vmatmul.mubr.bf16.gmra.mxu0 %v81
    %v309 = vpop.f32.mrf.mxu0
    %v310 = vadd.f32 0.0, %v309
    %v311 = vpop.f32.mrf.mxu0
    %v312 = vpop.f32.mrf.mxu0
    %v313 = vadd.f32 0.0, %v312
    %v314 = vpop.f32.mrf.mxu0
    %315 = vmatprep.mubr.bf16.mxu0 0
    %316 = vmatmul.mubr.bf16.gmra.mxu0 %v82
    %v317 = vpop.f32.mrf.mxu0
    %v318 = vadd.f32 0.0, %v317
    %v319 = vpop.f32.mrf.mxu0
    %v320 = vpop.f32.mrf.mxu0
    %v321 = vadd.f32 0.0, %v320
    %v322 = vpop.f32.mrf.mxu0
    %323 = vmatprep.mubr.bf16.mxu0 0
    %324 = vmatmul.mubr.bf16.gmra.mxu0 %v83
    %v325 = vpop.f32.mrf.mxu0
    %v326 = vadd.f32 0.0, %v325
    %v327 = vpop.f32.mrf.mxu0
    %v328 = vpop.f32.mrf.mxu0
    %v329 = vadd.f32 0.0, %v328
    %v330 = vpop.f32.mrf.mxu0
    %331 = vmatprep.mubr.bf16.mxu0 0
    %332 = vmatmul.mubr.bf16.gmra.mxu0 %v84
    %v333 = vpop.f32.mrf.mxu0
    %v334 = vadd.f32 0.0, %v333
    %v335 = vpop.f32.mrf.mxu0
    %v336 = vpop.f32.mrf.mxu0
    %v337 = vadd.f32 0.0, %v336
    %v338 = vpop.f32.mrf.mxu0
    %339 = vdwg.mxu0
    %v340 = vmax.f32 %v202, %v310
    %v341 = vmax.f32 %v203, %v313
    %v342 = vmax.f32 %v204, %v318
    %v343 = vmax.f32 %v205, %v321
    %v344 = vmax.f32 %v206, %v326
    %v345 = vmax.f32 %v207, %v329
    %v346 = vmax.f32 %v208, %v334
    %v347 = vmax.f32 %v209, %v337
    %s348 = scalar_lea.vmem [#allocation5], 128
    %v349 = vld [vmem:[%s348] sm:$0xf]
    %v350 = vld [vmem:[%s348 + $0x4] sm:$0xf]
    %v351 = vld [vmem:[%s348 + $0x8] sm:$0xf]
    %v352 = vld [vmem:[%s348 + $0xc] sm:$0xf]
    %v353 = vld [vmem:[%s348 + $0x10] sm:$0xf]
    %v354 = vld [vmem:[%s348 + $0x14] sm:$0xf]
    %v355 = vld [vmem:[%s348 + $0x18] sm:$0xf]
    %v356 = vld [vmem:[%s348 + $0x1c] sm:$0xf]
    %v357 = vld [vmem:[%s348 + $0x20] sm:$0xf]
    %v358 = vld [vmem:[%s348 + $0x24] sm:$0xf]
    %v359 = vld [vmem:[%s348 + $0x28] sm:$0xf]
    %v360 = vld [vmem:[%s348 + $0x2c] sm:$0xf]
    %v361 = vld [vmem:[%s348 + $0x30] sm:$0xf]
    %v362 = vld [vmem:[%s348 + $0x34] sm:$0xf]
    %v363 = vld [vmem:[%s348 + $0x38] sm:$0xf]
    %v364 = vld [vmem:[%s348 + $0x3c] sm:$0xf]
    %v381 = vunpack.c.l.b16 %v349
    %v382 = vunpack.c.l.b16 %v350
    %v383 = vunpack.c.l.b16 %v351
    %v384 = vunpack.c.l.b16 %v352
    %v385 = vunpack.c.l.b16 %v353
    %v386 = vunpack.c.l.b16 %v354
    %v387 = vunpack.c.l.b16 %v355
    %v388 = vunpack.c.l.b16 %v356
    %v389 = vunpack.c.l.b16 %v357
    %v390 = vunpack.c.l.b16 %v358
    %v391 = vunpack.c.l.b16 %v359
    %v392 = vunpack.c.l.b16 %v360
    %v393 = vunpack.c.l.b16 %v361
    %v394 = vunpack.c.l.b16 %v362
    %v395 = vunpack.c.l.b16 %v363
    %v396 = vunpack.c.l.b16 %v364
    %v397 = vpack.c.b16 %v382, %v381
    %v398 = vpack.c.b16 %v384, %v383
    %v399 = vpack.c.b16 %v386, %v385
    %v400 = vpack.c.b16 %v388, %v387
    %v401 = vpack.c.b16 %v390, %v389
    %v402 = vpack.c.b16 %v392, %v391
    %v403 = vpack.c.b16 %v394, %v393
    %v404 = vpack.c.b16 %v396, %v395
    %413 = vmatprep.subr.bf16.mxu0 0
    %414 = vmatpush1.bf16.msra.mxu0 %v404
    %415 = vmatprep.subr.bf16.mxu0 0
    %416 = vmatpush1.bf16.msra.mxu0 %v403
    %417 = vmatprep.subr.bf16.mxu0 0
    %418 = vmatpush1.bf16.msra.mxu0 %v402
    %419 = vmatprep.subr.bf16.mxu0 0
    %420 = vmatpush1.bf16.msra.mxu0 %v401
    %421 = vmatprep.subr.bf16.mxu0 0
    %422 = vmatpush1.bf16.msra.mxu0 %v400
    %423 = vmatprep.subr.bf16.mxu0 0
    %424 = vmatpush1.bf16.msra.mxu0 %v399
    %425 = vmatprep.subr.bf16.mxu0 0
    %426 = vmatpush1.bf16.msra.mxu0 %v398
    %427 = vmatprep.subr.bf16.mxu0 0
    %428 = vmatpush1.bf16.msra.mxu0 %v397
    %429 = vmatprep.subr.bf16.mxu0 0
    %430 = vmatpush2.bf16.msra.mxu0 0
    %431 = vmatprep.subr.bf16.mxu0 0
    %432 = vmatpush2.bf16.msra.mxu0 0
    %433 = vmatprep.subr.bf16.mxu0 0
    %434 = vmatpush2.bf16.msra.mxu0 0
    %435 = vmatprep.subr.bf16.mxu0 0
    %436 = vmatpush2.bf16.msra.mxu0 0
    %437 = vmatprep.subr.bf16.mxu0 0
    %438 = vmatpush2.bf16.msra.mxu0 0
    %439 = vmatprep.subr.bf16.mxu0 0
    %440 = vmatpush2.bf16.msra.mxu0 0
    %441 = vmatprep.subr.bf16.mxu0 0
    %442 = vmatpush2.bf16.msra.mxu0 0
    %443 = vmatprep.subr.bf16.mxu0 0
    %444 = vmatpush2.bf16.msra.mxu0 0
    %445 = vmatprep.mubr.bf16.mxu0 0
    %446 = vmatmul.mubr.bf16.gmra.mxu0 %v81
    %v447 = vpop.f32.mrf.mxu0
    %v448 = vadd.f32 0.0, %v447
    %v449 = vpop.f32.mrf.mxu0
    %v450 = vpop.f32.mrf.mxu0
    %v451 = vadd.f32 0.0, %v450
    %v452 = vpop.f32.mrf.mxu0
    %453 = vmatprep.mubr.bf16.mxu0 0
    %454 = vmatmul.mubr.bf16.gmra.mxu0 %v82
    %v455 = vpop.f32.mrf.mxu0
    %v456 = vadd.f32 0.0, %v455
    %v457 = vpop.f32.mrf.mxu0
    %v458 = vpop.f32.mrf.mxu0
    %v459 = vadd.f32 0.0, %v458
    %v460 = vpop.f32.mrf.mxu0
    %461 = vmatprep.mubr.bf16.mxu0 0
    %462 = vmatmul.mubr.bf16.gmra.mxu0 %v83
    %v463 = vpop.f32.mrf.mxu0
    %v464 = vadd.f32 0.0, %v463
    %v465 = vpop.f32.mrf.mxu0
    %v466 = vpop.f32.mrf.mxu0
    %v467 = vadd.f32 0.0, %v466
    %v468 = vpop.f32.mrf.mxu0
    %469 = vmatprep.mubr.bf16.mxu0 0
    %470 = vmatmul.mubr.bf16.gmra.mxu0 %v84
    %v471 = vpop.f32.mrf.mxu0
    %v472 = vadd.f32 0.0, %v471
    %v473 = vpop.f32.mrf.mxu0
    %v474 = vpop.f32.mrf.mxu0
    %v475 = vadd.f32 0.0, %v474
    %v476 = vpop.f32.mrf.mxu0
    %477 = vdwg.mxu0
    %v478 = vmax.f32 %v340, %v448
    %v479 = vmax.f32 %v341, %v451
    %v480 = vmax.f32 %v342, %v456
    %v481 = vmax.f32 %v343, %v459
    %v482 = vmax.f32 %v344, %v464
    %v483 = vmax.f32 %v345, %v467
    %v484 = vmax.f32 %v346, %v472
    %v485 = vmax.f32 %v347, %v475
    %s486 = scalar_lea.vmem [#allocation5], 192
    %v487 = vld [vmem:[%s486] sm:$0xf]
    %v488 = vld [vmem:[%s486 + $0x4] sm:$0xf]
    %v489 = vld [vmem:[%s486 + $0x8] sm:$0xf]
    %v490 = vld [vmem:[%s486 + $0xc] sm:$0xf]
    %v491 = vld [vmem:[%s486 + $0x10] sm:$0xf]
    %v492 = vld [vmem:[%s486 + $0x14] sm:$0xf]
    %v493 = vld [vmem:[%s486 + $0x18] sm:$0xf]
    %v494 = vld [vmem:[%s486 + $0x1c] sm:$0xf]
    %v495 = vld [vmem:[%s486 + $0x20] sm:$0xf]
    %v496 = vld [vmem:[%s486 + $0x24] sm:$0xf]
    %v497 = vld [vmem:[%s486 + $0x28] sm:$0xf]
    %v498 = vld [vmem:[%s486 + $0x2c] sm:$0xf]
    %v499 = vld [vmem:[%s486 + $0x30] sm:$0xf]
    %v500 = vld [vmem:[%s486 + $0x34] sm:$0xf]
    %v501 = vld [vmem:[%s486 + $0x38] sm:$0xf]
    %v502 = vld [vmem:[%s486 + $0x3c] sm:$0xf]
    %v519 = vunpack.c.l.b16 %v487
    %v520 = vunpack.c.l.b16 %v488
    %v521 = vunpack.c.l.b16 %v489
    %v522 = vunpack.c.l.b16 %v490
    %v523 = vunpack.c.l.b16 %v491
    %v524 = vunpack.c.l.b16 %v492
    %v525 = vunpack.c.l.b16 %v493
    %v526 = vunpack.c.l.b16 %v494
    %v527 = vunpack.c.l.b16 %v495
    %v528 = vunpack.c.l.b16 %v496
    %v529 = vunpack.c.l.b16 %v497
    %v530 = vunpack.c.l.b16 %v498
    %v531 = vunpack.c.l.b16 %v499
    %v532 = vunpack.c.l.b16 %v500
    %v533 = vunpack.c.l.b16 %v501
    %v534 = vunpack.c.l.b16 %v502
    %v535 = vpack.c.b16 %v520, %v519
    %v536 = vpack.c.b16 %v522, %v521
    %v537 = vpack.c.b16 %v524, %v523
    %v538 = vpack.c.b16 %v526, %v525
    %v539 = vpack.c.b16 %v528, %v527
    %v540 = vpack.c.b16 %v530, %v529
    %v541 = vpack.c.b16 %v532, %v531
    %v542 = vpack.c.b16 %v534, %v533
    %551 = vmatprep.subr.bf16.mxu0 0
    %552 = vmatpush1.bf16.msra.mxu0 %v542
    %553 = vmatprep.subr.bf16.mxu0 0
    %554 = vmatpush1.bf16.msra.mxu0 %v541
    %555 = vmatprep.subr.bf16.mxu0 0
    %556 = vmatpush1.bf16.msra.mxu0 %v540
    %557 = vmatprep.subr.bf16.mxu0 0
    %558 = vmatpush1.bf16.msra.mxu0 %v539
    %559 = vmatprep.subr.bf16.mxu0 0
    %560 = vmatpush1.bf16.msra.mxu0 %v538
    %561 = vmatprep.subr.bf16.mxu0 0
    %562 = vmatpush1.bf16.msra.mxu0 %v537
    %563 = vmatprep.subr.bf16.mxu0 0
    %564 = vmatpush1.bf16.msra.mxu0 %v536
    %565 = vmatprep.subr.bf16.mxu0 0
    %566 = vmatpush1.bf16.msra.mxu0 %v535
    %567 = vmatprep.subr.bf16.mxu0 0
    %568 = vmatpush2.bf16.msra.mxu0 0
    %569 = vmatprep.subr.bf16.mxu0 0
    %570 = vmatpush2.bf16.msra.mxu0 0
    %571 = vmatprep.subr.bf16.mxu0 0
    %572 = vmatpush2.bf16.msra.mxu0 0
    %573 = vmatprep.subr.bf16.mxu0 0
    %574 = vmatpush2.bf16.msra.mxu0 0
    %575 = vmatprep.subr.bf16.mxu0 0
    %576 = vmatpush2.bf16.msra.mxu0 0
    %577 = vmatprep.subr.bf16.mxu0 0
    %578 = vmatpush2.bf16.msra.mxu0 0
    %579 = vmatprep.subr.bf16.mxu0 0
    %580 = vmatpush2.bf16.msra.mxu0 0
    %581 = vmatprep.subr.bf16.mxu0 0
    %582 = vmatpush2.bf16.msra.mxu0 0
    %583 = vmatprep.mubr.bf16.mxu0 0
    %584 = vmatmul.mubr.bf16.gmra.mxu0 %v81
    %v585 = vpop.f32.mrf.mxu0
    %v586 = vadd.f32 0.0, %v585
    %v587 = vpop.f32.mrf.mxu0
    %v588 = vpop.f32.mrf.mxu0
    %v589 = vadd.f32 0.0, %v588
    %v590 = vpop.f32.mrf.mxu0
    %591 = vmatprep.mubr.bf16.mxu0 0
    %592 = vmatmul.mubr.bf16.gmra.mxu0 %v82
    %v593 = vpop.f32.mrf.mxu0
    %v594 = vadd.f32 0.0, %v593
    %v595 = vpop.f32.mrf.mxu0
    %v596 = vpop.f32.mrf.mxu0
    %v597 = vadd.f32 0.0, %v596
    %v598 = vpop.f32.mrf.mxu0
    %599 = vmatprep.mubr.bf16.mxu0 0
    %600 = vmatmul.mubr.bf16.gmra.mxu0 %v83
    %v601 = vpop.f32.mrf.mxu0
    %v602 = vadd.f32 0.0, %v601
    %v603 = vpop.f32.mrf.mxu0
    %v604 = vpop.f32.mrf.mxu0
    %v605 = vadd.f32 0.0, %v604
    %v606 = vpop.f32.mrf.mxu0
    %607 = vmatprep.mubr.bf16.mxu0 0
    %608 = vmatmul.mubr.bf16.gmra.mxu0 %v84
    %v609 = vpop.f32.mrf.mxu0
    %v610 = vadd.f32 0.0, %v609
    %v611 = vpop.f32.mrf.mxu0
    %v612 = vpop.f32.mrf.mxu0
    %v613 = vadd.f32 0.0, %v612
    %v614 = vpop.f32.mrf.mxu0
    %615 = vdwg.mxu0
    %v616 = vmax.f32 %v478, %v586
    %v617 = vmax.f32 %v479, %v589
    %v618 = vmax.f32 %v480, %v594
    %v619 = vmax.f32 %v481, %v597
    %v620 = vmax.f32 %v482, %v602
    %v621 = vmax.f32 %v483, %v605
    %v622 = vmax.f32 %v484, %v610
    %v623 = vmax.f32 %v485, %v613
    %s624 = scalar_lea.vmem [#allocation5], 256
    %v625 = vld [vmem:[%s624] sm:$0xf]
    %v626 = vld [vmem:[%s624 + $0x4] sm:$0xf]
    %v627 = vld [vmem:[%s624 + $0x8] sm:$0xf]
    %v628 = vld [vmem:[%s624 + $0xc] sm:$0xf]
    %v629 = vld [vmem:[%s624 + $0x10] sm:$0xf]
    %v630 = vld [vmem:[%s624 + $0x14] sm:$0xf]
    %v631 = vld [vmem:[%s624 + $0x18] sm:$0xf]
    %v632 = vld [vmem:[%s624 + $0x1c] sm:$0xf]
    %v633 = vld [vmem:[%s624 + $0x20] sm:$0xf]
    %v634 = vld [vmem:[%s624 + $0x24] sm:$0xf]
    %v635 = vld [vmem:[%s624 + $0x28] sm:$0xf]
    %v636 = vld [vmem:[%s624 + $0x2c] sm:$0xf]
    %v637 = vld [vmem:[%s624 + $0x30] sm:$0xf]
    %v638 = vld [vmem:[%s624 + $0x34] sm:$0xf]
    %v639 = vld [vmem:[%s624 + $0x38] sm:$0xf]
    %v640 = vld [vmem:[%s624 + $0x3c] sm:$0xf]
    %v657 = vunpack.c.l.b16 %v625
    %v658 = vunpack.c.l.b16 %v626
    %v659 = vunpack.c.l.b16 %v627
    %v660 = vunpack.c.l.b16 %v628
    %v661 = vunpack.c.l.b16 %v629
    %v662 = vunpack.c.l.b16 %v630
    %v663 = vunpack.c.l.b16 %v631
    %v664 = vunpack.c.l.b16 %v632
    %v665 = vunpack.c.l.b16 %v633
    %v666 = vunpack.c.l.b16 %v634
    %v667 = vunpack.c.l.b16 %v635
    %v668 = vunpack.c.l.b16 %v636
    %v669 = vunpack.c.l.b16 %v637
    %v670 = vunpack.c.l.b16 %v638
    %v671 = vunpack.c.l.b16 %v639
    %v672 = vunpack.c.l.b16 %v640
    %v673 = vpack.c.b16 %v658, %v657
    %v674 = vpack.c.b16 %v660, %v659
    %v675 = vpack.c.b16 %v662, %v661
    %v676 = vpack.c.b16 %v664, %v663
    %v677 = vpack.c.b16 %v666, %v665
    %v678 = vpack.c.b16 %v668, %v667
    %v679 = vpack.c.b16 %v670, %v669
    %v680 = vpack.c.b16 %v672, %v671
    %689 = vmatprep.subr.bf16.mxu0 0
    %690 = vmatpush1.bf16.msra.mxu0 %v680
    %691 = vmatprep.subr.bf16.mxu0 0
    %692 = vmatpush1.bf16.msra.mxu0 %v679
    %693 = vmatprep.subr.bf16.mxu0 0
    %694 = vmatpush1.bf16.msra.mxu0 %v678
    %695 = vmatprep.subr.bf16.mxu0 0
    %696 = vmatpush1.bf16.msra.mxu0 %v677
    %697 = vmatprep.subr.bf16.mxu0 0
    %698 = vmatpush1.bf16.msra.mxu0 %v676
    %699 = vmatprep.subr.bf16.mxu0 0
    %700 = vmatpush1.bf16.msra.mxu0 %v675
    %701 = vmatprep.subr.bf16.mxu0 0
    %702 = vmatpush1.bf16.msra.mxu0 %v674
    %703 = vmatprep.subr.bf16.mxu0 0
    %704 = vmatpush1.bf16.msra.mxu0 %v673
    %705 = vmatprep.subr.bf16.mxu0 0
    %706 = vmatpush2.bf16.msra.mxu0 0
    %707 = vmatprep.subr.bf16.mxu0 0
    %708 = vmatpush2.bf16.msra.mxu0 0
    %709 = vmatprep.subr.bf16.mxu0 0
    %710 = vmatpush2.bf16.msra.mxu0 0
    %711 = vmatprep.subr.bf16.mxu0 0
    %712 = vmatpush2.bf16.msra.mxu0 0
    %713 = vmatprep.subr.bf16.mxu0 0
    %714 = vmatpush2.bf16.msra.mxu0 0
    %715 = vmatprep.subr.bf16.mxu0 0
    %716 = vmatpush2.bf16.msra.mxu0 0
    %717 = vmatprep.subr.bf16.mxu0 0
    %718 = vmatpush2.bf16.msra.mxu0 0
    %719 = vmatprep.subr.bf16.mxu0 0
    %720 = vmatpush2.bf16.msra.mxu0 0
    %721 = vmatprep.mubr.bf16.mxu0 0
    %722 = vmatmul.mubr.bf16.gmra.mxu0 %v81
    %v723 = vpop.f32.mrf.mxu0
    %v724 = vadd.f32 0.0, %v723
    %v725 = vpop.f32.mrf.mxu0
    %v726 = vpop.f32.mrf.mxu0
    %v727 = vadd.f32 0.0, %v726
    %v728 = vpop.f32.mrf.mxu0
    %729 = vmatprep.mubr.bf16.mxu0 0
    %730 = vmatmul.mubr.bf16.gmra.mxu0 %v82
    %v731 = vpop.f32.mrf.mxu0
    %v732 = vadd.f32 0.0, %v731
    %v733 = vpop.f32.mrf.mxu0
    %v734 = vpop.f32.mrf.mxu0
    %v735 = vadd.f32 0.0, %v734
    %v736 = vpop.f32.mrf.mxu0
    %737 = vmatprep.mubr.bf16.mxu0 0
    %738 = vmatmul.mubr.bf16.gmra.mxu0 %v83
    %v739 = vpop.f32.mrf.mxu0
    %v740 = vadd.f32 0.0, %v739
    %v741 = vpop.f32.mrf.mxu0
    %v742 = vpop.f32.mrf.mxu0
    %v743 = vadd.f32 0.0, %v742
    %v744 = vpop.f32.mrf.mxu0
    %745 = vmatprep.mubr.bf16.mxu0 0
    %746 = vmatmul.mubr.bf16.gmra.mxu0 %v84
    %v747 = vpop.f32.mrf.mxu0
    %v748 = vadd.f32 0.0, %v747
    %v749 = vpop.f32.mrf.mxu0
    %v750 = vpop.f32.mrf.mxu0
    %v751 = vadd.f32 0.0, %v750
    %v752 = vpop.f32.mrf.mxu0
    %753 = vdwg.mxu0
    %v754 = vmax.f32 %v616, %v724
    %v755 = vmax.f32 %v617, %v727
    %v756 = vmax.f32 %v618, %v732
    %v757 = vmax.f32 %v619, %v735
    %v758 = vmax.f32 %v620, %v740
    %v759 = vmax.f32 %v621, %v743
    %v760 = vmax.f32 %v622, %v748
    %v761 = vmax.f32 %v623, %v751
    %s762 = scalar_lea.vmem [#allocation5], 320
    %v763 = vld [vmem:[%s762] sm:$0xf]
    %v764 = vld [vmem:[%s762 + $0x4] sm:$0xf]
    %v765 = vld [vmem:[%s762 + $0x8] sm:$0xf]
    %v766 = vld [vmem:[%s762 + $0xc] sm:$0xf]
    %v767 = vld [vmem:[%s762 + $0x10] sm:$0xf]
    %v768 = vld [vmem:[%s762 + $0x14] sm:$0xf]
    %v769 = vld [vmem:[%s762 + $0x18] sm:$0xf]
    %v770 = vld [vmem:[%s762 + $0x1c] sm:$0xf]
    %v771 = vld [vmem:[%s762 + $0x20] sm:$0xf]
    %v772 = vld [vmem:[%s762 + $0x24] sm:$0xf]
    %v773 = vld [vmem:[%s762 + $0x28] sm:$0xf]
    %v774 = vld [vmem:[%s762 + $0x2c] sm:$0xf]
    %v775 = vld [vmem:[%s762 + $0x30] sm:$0xf]
    %v776 = vld [vmem:[%s762 + $0x34] sm:$0xf]
    %v777 = vld [vmem:[%s762 + $0x38] sm:$0xf]
    %v778 = vld [vmem:[%s762 + $0x3c] sm:$0xf]
    %v795 = vunpack.c.l.b16 %v763
    %v796 = vunpack.c.l.b16 %v764
    %v797 = vunpack.c.l.b16 %v765
    %v798 = vunpack.c.l.b16 %v766
    %v799 = vunpack.c.l.b16 %v767
    %v800 = vunpack.c.l.b16 %v768
    %v801 = vunpack.c.l.b16 %v769
    %v802 = vunpack.c.l.b16 %v770
    %v803 = vunpack.c.l.b16 %v771
    %v804 = vunpack.c.l.b16 %v772
    %v805 = vunpack.c.l.b16 %v773
    %v806 = vunpack.c.l.b16 %v774
    %v807 = vunpack.c.l.b16 %v775
    %v808 = vunpack.c.l.b16 %v776
    %v809 = vunpack.c.l.b16 %v777
    %v810 = vunpack.c.l.b16 %v778
    %v811 = vpack.c.b16 %v796, %v795
    %v812 = vpack.c.b16 %v798, %v797
    %v813 = vpack.c.b16 %v800, %v799
    %v814 = vpack.c.b16 %v802, %v801
    %v815 = vpack.c.b16 %v804, %v803
    %v816 = vpack.c.b16 %v806, %v805
    %v817 = vpack.c.b16 %v808, %v807
    %v818 = vpack.c.b16 %v810, %v809
    %827 = vmatprep.subr.bf16.mxu0 0
    %828 = vmatpush1.bf16.msra.mxu0 %v818
    %829 = vmatprep.subr.bf16.mxu0 0
    %830 = vmatpush1.bf16.msra.mxu0 %v817
    %831 = vmatprep.subr.bf16.mxu0 0
    %832 = vmatpush1.bf16.msra.mxu0 %v816
    %833 = vmatprep.subr.bf16.mxu0 0
    %834 = vmatpush1.bf16.msra.mxu0 %v815
    %835 = vmatprep.subr.bf16.mxu0 0
    %836 = vmatpush1.bf16.msra.mxu0 %v814
    %837 = vmatprep.subr.bf16.mxu0 0
    %838 = vmatpush1.bf16.msra.mxu0 %v813
    %839 = vmatprep.subr.bf16.mxu0 0
    %840 = vmatpush1.bf16.msra.mxu0 %v812
    %841 = vmatprep.subr.bf16.mxu0 0
    %842 = vmatpush1.bf16.msra.mxu0 %v811
    %843 = vmatprep.subr.bf16.mxu0 0
    %844 = vmatpush2.bf16.msra.mxu0 0
    %845 = vmatprep.subr.bf16.mxu0 0
    %846 = vmatpush2.bf16.msra.mxu0 0
    %847 = vmatprep.subr.bf16.mxu0 0
    %848 = vmatpush2.bf16.msra.mxu0 0
    %849 = vmatprep.subr.bf16.mxu0 0
    %850 = vmatpush2.bf16.msra.mxu0 0
    %851 = vmatprep.subr.bf16.mxu0 0
    %852 = vmatpush2.bf16.msra.mxu0 0
    %853 = vmatprep.subr.bf16.mxu0 0
    %854 = vmatpush2.bf16.msra.mxu0 0
    %855 = vmatprep.subr.bf16.mxu0 0
    %856 = vmatpush2.bf16.msra.mxu0 0
    %857 = vmatprep.subr.bf16.mxu0 0
    %858 = vmatpush2.bf16.msra.mxu0 0
    %859 = vmatprep.mubr.bf16.mxu0 0
    %860 = vmatmul.mubr.bf16.gmra.mxu0 %v81
    %v861 = vpop.f32.mrf.mxu0
    %v862 = vadd.f32 0.0, %v861
    %v863 = vpop.f32.mrf.mxu0
    %v864 = vpop.f32.mrf.mxu0
    %v865 = vadd.f32 0.0, %v864
    %v866 = vpop.f32.mrf.mxu0
    %867 = vmatprep.mubr.bf16.mxu0 0
    %868 = vmatmul.mubr.bf16.gmra.mxu0 %v82
    %v869 = vpop.f32.mrf.mxu0
    %v870 = vadd.f32 0.0, %v869
    %v871 = vpop.f32.mrf.mxu0
    %v872 = vpop.f32.mrf.mxu0
    %v873 = vadd.f32 0.0, %v872
    %v874 = vpop.f32.mrf.mxu0
    %875 = vmatprep.mubr.bf16.mxu0 0
    %876 = vmatmul.mubr.bf16.gmra.mxu0 %v83
    %v877 = vpop.f32.mrf.mxu0
    %v878 = vadd.f32 0.0, %v877
    %v879 = vpop.f32.mrf.mxu0
    %v880 = vpop.f32.mrf.mxu0
    %v881 = vadd.f32 0.0, %v880
    %v882 = vpop.f32.mrf.mxu0
    %883 = vmatprep.mubr.bf16.mxu0 0
    %884 = vmatmul.mubr.bf16.gmra.mxu0 %v84
    %v885 = vpop.f32.mrf.mxu0
    %v886 = vadd.f32 0.0, %v885
    %v887 = vpop.f32.mrf.mxu0
    %v888 = vpop.f32.mrf.mxu0
    %v889 = vadd.f32 0.0, %v888
    %v890 = vpop.f32.mrf.mxu0
    %891 = vdwg.mxu0
    %v892 = vmax.f32 %v754, %v862
    %v893 = vmax.f32 %v755, %v865
    %v894 = vmax.f32 %v756, %v870
    %v895 = vmax.f32 %v757, %v873
    %v896 = vmax.f32 %v758, %v878
    %v897 = vmax.f32 %v759, %v881
    %v898 = vmax.f32 %v760, %v886
    %v899 = vmax.f32 %v761, %v889
    %s900 = scalar_lea.vmem [#allocation5], 384
    %v901 = vld [vmem:[%s900] sm:$0xf]
    %v902 = vld [vmem:[%s900 + $0x4] sm:$0xf]
    %v903 = vld [vmem:[%s900 + $0x8] sm:$0xf]
    %v904 = vld [vmem:[%s900 + $0xc] sm:$0xf]
    %v905 = vld [vmem:[%s900 + $0x10] sm:$0xf]
    %v906 = vld [vmem:[%s900 + $0x14] sm:$0xf]
    %v907 = vld [vmem:[%s900 + $0x18] sm:$0xf]
    %v908 = vld [vmem:[%s900 + $0x1c] sm:$0xf]
    %v909 = vld [vmem:[%s900 + $0x20] sm:$0xf]
    %v910 = vld [vmem:[%s900 + $0x24] sm:$0xf]
    %v911 = vld [vmem:[%s900 + $0x28] sm:$0xf]
    %v912 = vld [vmem:[%s900 + $0x2c] sm:$0xf]
    %v913 = vld [vmem:[%s900 + $0x30] sm:$0xf]
    %v914 = vld [vmem:[%s900 + $0x34] sm:$0xf]
    %v915 = vld [vmem:[%s900 + $0x38] sm:$0xf]
    %v916 = vld [vmem:[%s900 + $0x3c] sm:$0xf]
    %v933 = vunpack.c.l.b16 %v901
    %v934 = vunpack.c.l.b16 %v902
    %v935 = vunpack.c.l.b16 %v903
    %v936 = vunpack.c.l.b16 %v904
    %v937 = vunpack.c.l.b16 %v905
    %v938 = vunpack.c.l.b16 %v906
    %v939 = vunpack.c.l.b16 %v907
    %v940 = vunpack.c.l.b16 %v908
    %v941 = vunpack.c.l.b16 %v909
    %v942 = vunpack.c.l.b16 %v910
    %v943 = vunpack.c.l.b16 %v911
    %v944 = vunpack.c.l.b16 %v912
    %v945 = vunpack.c.l.b16 %v913
    %v946 = vunpack.c.l.b16 %v914
    %v947 = vunpack.c.l.b16 %v915
    %v948 = vunpack.c.l.b16 %v916
    %v949 = vpack.c.b16 %v934, %v933
    %v950 = vpack.c.b16 %v936, %v935
    %v951 = vpack.c.b16 %v938, %v937
    %v952 = vpack.c.b16 %v940, %v939
    %v953 = vpack.c.b16 %v942, %v941
    %v954 = vpack.c.b16 %v944, %v943
    %v955 = vpack.c.b16 %v946, %v945
    %v956 = vpack.c.b16 %v948, %v947
    %965 = vmatprep.subr.bf16.mxu0 0
    %966 = vmatpush1.bf16.msra.mxu0 %v956
    %967 = vmatprep.subr.bf16.mxu0 0
    %968 = vmatpush1.bf16.msra.mxu0 %v955
    %969 = vmatprep.subr.bf16.mxu0 0
    %970 = vmatpush1.bf16.msra.mxu0 %v954
    %971 = vmatprep.subr.bf16.mxu0 0
    %972 = vmatpush1.bf16.msra.mxu0 %v953
    %973 = vmatprep.subr.bf16.mxu0 0
    %974 = vmatpush1.bf16.msra.mxu0 %v952
    %975 = vmatprep.subr.bf16.mxu0 0
    %976 = vmatpush1.bf16.msra.mxu0 %v951
    %977 = vmatprep.subr.bf16.mxu0 0
    %978 = vmatpush1.bf16.msra.mxu0 %v950
    %979 = vmatprep.subr.bf16.mxu0 0
    %980 = vmatpush1.bf16.msra.mxu0 %v949
    %981 = vmatprep.subr.bf16.mxu0 0
    %982 = vmatpush2.bf16.msra.mxu0 0
    %983 = vmatprep.subr.bf16.mxu0 0
    %984 = vmatpush2.bf16.msra.mxu0 0
    %985 = vmatprep.subr.bf16.mxu0 0
    %986 = vmatpush2.bf16.msra.mxu0 0
    %987 = vmatprep.subr.bf16.mxu0 0
    %988 = vmatpush2.bf16.msra.mxu0 0
    %989 = vmatprep.subr.bf16.mxu0 0
    %990 = vmatpush2.bf16.msra.mxu0 0
    %991 = vmatprep.subr.bf16.mxu0 0
    %992 = vmatpush2.bf16.msra.mxu0 0
    %993 = vmatprep.subr.bf16.mxu0 0
    %994 = vmatpush2.bf16.msra.mxu0 0
    %995 = vmatprep.subr.bf16.mxu0 0
    %996 = vmatpush2.bf16.msra.mxu0 0
    %997 = vmatprep.mubr.bf16.mxu0 0
    %998 = vmatmul.mubr.bf16.gmra.mxu0 %v81
    %v999 = vpop.f32.mrf.mxu0
    %v1000 = vadd.f32 0.0, %v999
    %v1001 = vpop.f32.mrf.mxu0
    %v1002 = vpop.f32.mrf.mxu0
    %v1003 = vadd.f32 0.0, %v1002
    %v1004 = vpop.f32.mrf.mxu0
    %1005 = vmatprep.mubr.bf16.mxu0 0
    %1006 = vmatmul.mubr.bf16.gmra.mxu0 %v82
    %v1007 = vpop.f32.mrf.mxu0
    %v1008 = vadd.f32 0.0, %v1007
    %v1009 = vpop.f32.mrf.mxu0
    %v1010 = vpop.f32.mrf.mxu0
    %v1011 = vadd.f32 0.0, %v1010
    %v1012 = vpop.f32.mrf.mxu0
    %1013 = vmatprep.mubr.bf16.mxu0 0
    %1014 = vmatmul.mubr.bf16.gmra.mxu0 %v83
    %v1015 = vpop.f32.mrf.mxu0
    %v1016 = vadd.f32 0.0, %v1015
    %v1017 = vpop.f32.mrf.mxu0
    %v1018 = vpop.f32.mrf.mxu0
    %v1019 = vadd.f32 0.0, %v1018
    %v1020 = vpop.f32.mrf.mxu0
    %1021 = vmatprep.mubr.bf16.mxu0 0
    %1022 = vmatmul.mubr.bf16.gmra.mxu0 %v84
    %v1023 = vpop.f32.mrf.mxu0
    %v1024 = vadd.f32 0.0, %v1023
    %v1025 = vpop.f32.mrf.mxu0
    %v1026 = vpop.f32.mrf.mxu0
    %v1027 = vadd.f32 0.0, %v1026
    %v1028 = vpop.f32.mrf.mxu0
    %1029 = vdwg.mxu0
    %v1030 = vmax.f32 %v892, %v1000
    %v1031 = vmax.f32 %v893, %v1003
    %v1032 = vmax.f32 %v894, %v1008
    %v1033 = vmax.f32 %v895, %v1011
    %v1034 = vmax.f32 %v896, %v1016
    %v1035 = vmax.f32 %v897, %v1019
    %v1036 = vmax.f32 %v898, %v1024
    %v1037 = vmax.f32 %v899, %v1027
    %s1038 = scalar_lea.vmem [#allocation5], 448
    %v1039 = vld [vmem:[%s1038] sm:$0xf]
    %v1040 = vld [vmem:[%s1038 + $0x4] sm:$0xf]
    %v1041 = vld [vmem:[%s1038 + $0x8] sm:$0xf]
    %v1042 = vld [vmem:[%s1038 + $0xc] sm:$0xf]
    %v1043 = vld [vmem:[%s1038 + $0x10] sm:$0xf]
    %v1044 = vld [vmem:[%s1038 + $0x14] sm:$0xf]
    %v1045 = vld [vmem:[%s1038 + $0x18] sm:$0xf]
    %v1046 = vld [vmem:[%s1038 + $0x1c] sm:$0xf]
    %v1047 = vld [vmem:[%s1038 + $0x20] sm:$0xf]
    %v1048 = vld [vmem:[%s1038 + $0x24] sm:$0xf]
    %v1049 = vld [vmem:[%s1038 + $0x28] sm:$0xf]
    %v1050 = vld [vmem:[%s1038 + $0x2c] sm:$0xf]
    %v1051 = vld [vmem:[%s1038 + $0x30] sm:$0xf]
    %v1052 = vld [vmem:[%s1038 + $0x34] sm:$0xf]
    %v1053 = vld [vmem:[%s1038 + $0x38] sm:$0xf]
    %v1054 = vld [vmem:[%s1038 + $0x3c] sm:$0xf]
    %v1071 = vunpack.c.l.b16 %v1039
    %v1072 = vunpack.c.l.b16 %v1040
    %v1073 = vunpack.c.l.b16 %v1041
    %v1074 = vunpack.c.l.b16 %v1042
    %v1075 = vunpack.c.l.b16 %v1043
    %v1076 = vunpack.c.l.b16 %v1044
    %v1077 = vunpack.c.l.b16 %v1045
    %v1078 = vunpack.c.l.b16 %v1046
    %v1079 = vunpack.c.l.b16 %v1047
    %v1080 = vunpack.c.l.b16 %v1048
    %v1081 = vunpack.c.l.b16 %v1049
    %v1082 = vunpack.c.l.b16 %v1050
    %v1083 = vunpack.c.l.b16 %v1051
    %v1084 = vunpack.c.l.b16 %v1052
    %v1085 = vunpack.c.l.b16 %v1053
    %v1086 = vunpack.c.l.b16 %v1054
    %v1087 = vpack.c.b16 %v1072, %v1071
    %v1088 = vpack.c.b16 %v1074, %v1073
    %v1089 = vpack.c.b16 %v1076, %v1075
    %v1090 = vpack.c.b16 %v1078, %v1077
    %v1091 = vpack.c.b16 %v1080, %v1079
    %v1092 = vpack.c.b16 %v1082, %v1081
    %v1093 = vpack.c.b16 %v1084, %v1083
    %v1094 = vpack.c.b16 %v1086, %v1085
    %1103 = vmatprep.subr.bf16.mxu0 0
    %1104 = vmatpush1.bf16.msra.mxu0 %v1094
    %1105 = vmatprep.subr.bf16.mxu0 0
    %1106 = vmatpush1.bf16.msra.mxu0 %v1093
    %1107 = vmatprep.subr.bf16.mxu0 0
    %1108 = vmatpush1.bf16.msra.mxu0 %v1092
    %1109 = vmatprep.subr.bf16.mxu0 0
    %1110 = vmatpush1.bf16.msra.mxu0 %v1091
    %1111 = vmatprep.subr.bf16.mxu0 0
    %1112 = vmatpush1.bf16.msra.mxu0 %v1090
    %1113 = vmatprep.subr.bf16.mxu0 0
    %1114 = vmatpush1.bf16.msra.mxu0 %v1089
    %1115 = vmatprep.subr.bf16.mxu0 0
    %1116 = vmatpush1.bf16.msra.mxu0 %v1088
    %1117 = vmatprep.subr.bf16.mxu0 0
    %1118 = vmatpush1.bf16.msra.mxu0 %v1087
    %1119 = vmatprep.subr.bf16.mxu0 0
    %1120 = vmatpush2.bf16.msra.mxu0 0
    %1121 = vmatprep.subr.bf16.mxu0 0
    %1122 = vmatpush2.bf16.msra.mxu0 0
    %1123 = vmatprep.subr.bf16.mxu0 0
    %1124 = vmatpush2.bf16.msra.mxu0 0
    %1125 = vmatprep.subr.bf16.mxu0 0
    %1126 = vmatpush2.bf16.msra.mxu0 0
    %1127 = vmatprep.subr.bf16.mxu0 0
    %1128 = vmatpush2.bf16.msra.mxu0 0
    %1129 = vmatprep.subr.bf16.mxu0 0
    %1130 = vmatpush2.bf16.msra.mxu0 0
    %1131 = vmatprep.subr.bf16.mxu0 0
    %1132 = vmatpush2.bf16.msra.mxu0 0
    %1133 = vmatprep.subr.bf16.mxu0 0
    %1134 = vmatpush2.bf16.msra.mxu0 0
    %1135 = vmatprep.mubr.bf16.mxu0 0
    %1136 = vmatmul.mubr.bf16.gmra.mxu0 %v81
    %v1137 = vpop.f32.mrf.mxu0
    %v1138 = vadd.f32 0.0, %v1137
    %v1139 = vpop.f32.mrf.mxu0
    %v1140 = vpop.f32.mrf.mxu0
    %v1141 = vadd.f32 0.0, %v1140
    %v1142 = vpop.f32.mrf.mxu0
    %1143 = vmatprep.mubr.bf16.mxu0 0
    %1144 = vmatmul.mubr.bf16.gmra.mxu0 %v82
    %v1145 = vpop.f32.mrf.mxu0
    %v1146 = vadd.f32 0.0, %v1145
    %v1147 = vpop.f32.mrf.mxu0
    %v1148 = vpop.f32.mrf.mxu0
    %v1149 = vadd.f32 0.0, %v1148
    %v1150 = vpop.f32.mrf.mxu0
    %1151 = vmatprep.mubr.bf16.mxu0 0
    %1152 = vmatmul.mubr.bf16.gmra.mxu0 %v83
    %v1153 = vpop.f32.mrf.mxu0
    %v1154 = vadd.f32 0.0, %v1153
    %v1155 = vpop.f32.mrf.mxu0
    %v1156 = vpop.f32.mrf.mxu0
    %v1157 = vadd.f32 0.0, %v1156
    %v1158 = vpop.f32.mrf.mxu0
    %1159 = vmatprep.mubr.bf16.mxu0 0
    %1160 = vmatmul.mubr.bf16.gmra.mxu0 %v84
    %v1161 = vpop.f32.mrf.mxu0
    %v1162 = vadd.f32 0.0, %v1161
    %v1163 = vpop.f32.mrf.mxu0
    %v1164 = vpop.f32.mrf.mxu0
    %v1165 = vadd.f32 0.0, %v1164
    %v1166 = vpop.f32.mrf.mxu0
    %1167 = vdwg.mxu0
    %v1168 = vmax.f32 %v1030, %v1138
    %v1169 = vmax.f32 %v1031, %v1141
    %v1170 = vmax.f32 %v1032, %v1146
    %v1171 = vmax.f32 %v1033, %v1149
    %v1172 = vmax.f32 %v1034, %v1154
    %v1173 = vmax.f32 %v1035, %v1157
    %v1174 = vmax.f32 %v1036, %v1162
    %v1175 = vmax.f32 %v1037, %v1165
    %s1176 = scalar_lea.vmem [#allocation5], 512
    %v1177 = vld [vmem:[%s1176] sm:$0xf]
    %v1178 = vld [vmem:[%s1176 + $0x4] sm:$0xf]
    %v1179 = vld [vmem:[%s1176 + $0x8] sm:$0xf]
    %v1180 = vld [vmem:[%s1176 + $0xc] sm:$0xf]
    %v1181 = vld [vmem:[%s1176 + $0x10] sm:$0xf]
    %v1182 = vld [vmem:[%s1176 + $0x14] sm:$0xf]
    %v1183 = vld [vmem:[%s1176 + $0x18] sm:$0xf]
    %v1184 = vld [vmem:[%s1176 + $0x1c] sm:$0xf]
    %v1185 = vld [vmem:[%s1176 + $0x20] sm:$0xf]
    %v1186 = vld [vmem:[%s1176 + $0x24] sm:$0xf]
    %v1187 = vld [vmem:[%s1176 + $0x28] sm:$0xf]
    %v1188 = vld [vmem:[%s1176 + $0x2c] sm:$0xf]
    %v1189 = vld [vmem:[%s1176 + $0x30] sm:$0xf]
    %v1190 = vld [vmem:[%s1176 + $0x34] sm:$0xf]
    %v1191 = vld [vmem:[%s1176 + $0x38] sm:$0xf]
    %v1192 = vld [vmem:[%s1176 + $0x3c] sm:$0xf]
    %v1209 = vunpack.c.l.b16 %v1177
    %v1210 = vunpack.c.l.b16 %v1178
    %v1211 = vunpack.c.l.b16 %v1179
    %v1212 = vunpack.c.l.b16 %v1180
    %v1213 = vunpack.c.l.b16 %v1181
    %v1214 = vunpack.c.l.b16 %v1182
    %v1215 = vunpack.c.l.b16 %v1183
    %v1216 = vunpack.c.l.b16 %v1184
    %v1217 = vunpack.c.l.b16 %v1185
    %v1218 = vunpack.c.l.b16 %v1186
    %v1219 = vunpack.c.l.b16 %v1187
    %v1220 = vunpack.c.l.b16 %v1188
    %v1221 = vunpack.c.l.b16 %v1189
    %v1222 = vunpack.c.l.b16 %v1190
    %v1223 = vunpack.c.l.b16 %v1191
    %v1224 = vunpack.c.l.b16 %v1192
    %v1225 = vpack.c.b16 %v1210, %v1209
    %v1226 = vpack.c.b16 %v1212, %v1211
    %v1227 = vpack.c.b16 %v1214, %v1213
    %v1228 = vpack.c.b16 %v1216, %v1215
    %v1229 = vpack.c.b16 %v1218, %v1217
    %v1230 = vpack.c.b16 %v1220, %v1219
    %v1231 = vpack.c.b16 %v1222, %v1221
    %v1232 = vpack.c.b16 %v1224, %v1223
    %1241 = vmatprep.subr.bf16.mxu0 0
    %1242 = vmatpush1.bf16.msra.mxu0 %v1232
    %1243 = vmatprep.subr.bf16.mxu0 0
    %1244 = vmatpush1.bf16.msra.mxu0 %v1231
    %1245 = vmatprep.subr.bf16.mxu0 0
    %1246 = vmatpush1.bf16.msra.mxu0 %v1230
    %1247 = vmatprep.subr.bf16.mxu0 0
    %1248 = vmatpush1.bf16.msra.mxu0 %v1229
    %1249 = vmatprep.subr.bf16.mxu0 0
    %1250 = vmatpush1.bf16.msra.mxu0 %v1228
    %1251 = vmatprep.subr.bf16.mxu0 0
    %1252 = vmatpush1.bf16.msra.mxu0 %v1227
    %1253 = vmatprep.subr.bf16.mxu0 0
    %1254 = vmatpush1.bf16.msra.mxu0 %v1226
    %1255 = vmatprep.subr.bf16.mxu0 0
    %1256 = vmatpush1.bf16.msra.mxu0 %v1225
    %1257 = vmatprep.subr.bf16.mxu0 0
    %1258 = vmatpush2.bf16.msra.mxu0 0
    %1259 = vmatprep.subr.bf16.mxu0 0
    %1260 = vmatpush2.bf16.msra.mxu0 0
    %1261 = vmatprep.subr.bf16.mxu0 0
    %1262 = vmatpush2.bf16.msra.mxu0 0
    %1263 = vmatprep.subr.bf16.mxu0 0
    %1264 = vmatpush2.bf16.msra.mxu0 0
    %1265 = vmatprep.subr.bf16.mxu0 0
    %1266 = vmatpush2.bf16.msra.mxu0 0
    %1267 = vmatprep.subr.bf16.mxu0 0
    %1268 = vmatpush2.bf16.msra.mxu0 0
    %1269 = vmatprep.subr.bf16.mxu0 0
    %1270 = vmatpush2.bf16.msra.mxu0 0
    %1271 = vmatprep.subr.bf16.mxu0 0
    %1272 = vmatpush2.bf16.msra.mxu0 0
    %1273 = vmatprep.mubr.bf16.mxu0 0
    %1274 = vmatmul.mubr.bf16.gmra.mxu0 %v81
    %v1275 = vpop.f32.mrf.mxu0
    %v1276 = vadd.f32 0.0, %v1275
    %v1277 = vpop.f32.mrf.mxu0
    %v1278 = vpop.f32.mrf.mxu0
    %v1279 = vadd.f32 0.0, %v1278
    %v1280 = vpop.f32.mrf.mxu0
    %1281 = vmatprep.mubr.bf16.mxu0 0
    %1282 = vmatmul.mubr.bf16.gmra.mxu0 %v82
    %v1283 = vpop.f32.mrf.mxu0
    %v1284 = vadd.f32 0.0, %v1283
    %v1285 = vpop.f32.mrf.mxu0
    %v1286 = vpop.f32.mrf.mxu0
    %v1287 = vadd.f32 0.0, %v1286
    %v1288 = vpop.f32.mrf.mxu0
    %1289 = vmatprep.mubr.bf16.mxu0 0
    %1290 = vmatmul.mubr.bf16.gmra.mxu0 %v83
    %v1291 = vpop.f32.mrf.mxu0
    %v1292 = vadd.f32 0.0, %v1291
    %v1293 = vpop.f32.mrf.mxu0
    %v1294 = vpop.f32.mrf.mxu0
    %v1295 = vadd.f32 0.0, %v1294
    %v1296 = vpop.f32.mrf.mxu0
    %1297 = vmatprep.mubr.bf16.mxu0 0
    %1298 = vmatmul.mubr.bf16.gmra.mxu0 %v84
    %v1299 = vpop.f32.mrf.mxu0
    %v1300 = vadd.f32 0.0, %v1299
    %v1301 = vpop.f32.mrf.mxu0
    %v1302 = vpop.f32.mrf.mxu0
    %v1303 = vadd.f32 0.0, %v1302
    %v1304 = vpop.f32.mrf.mxu0
    %1305 = vdwg.mxu0
    %v1306 = vmax.f32 %v1168, %v1276
    %v1307 = vmax.f32 %v1169, %v1279
    %v1308 = vmax.f32 %v1170, %v1284
    %v1309 = vmax.f32 %v1171, %v1287
    %v1310 = vmax.f32 %v1172, %v1292
    %v1311 = vmax.f32 %v1173, %v1295
    %v1312 = vmax.f32 %v1174, %v1300
    %v1313 = vmax.f32 %v1175, %v1303
    %s1314 = scalar_lea.vmem [#allocation5], 576
    %v1315 = vld [vmem:[%s1314] sm:$0xf]
    %v1316 = vld [vmem:[%s1314 + $0x4] sm:$0xf]
    %v1317 = vld [vmem:[%s1314 + $0x8] sm:$0xf]
    %v1318 = vld [vmem:[%s1314 + $0xc] sm:$0xf]
    %v1319 = vld [vmem:[%s1314 + $0x10] sm:$0xf]
    %v1320 = vld [vmem:[%s1314 + $0x14] sm:$0xf]
    %v1321 = vld [vmem:[%s1314 + $0x18] sm:$0xf]
    %v1322 = vld [vmem:[%s1314 + $0x1c] sm:$0xf]
    %v1323 = vld [vmem:[%s1314 + $0x20] sm:$0xf]
    %v1324 = vld [vmem:[%s1314 + $0x24] sm:$0xf]
    %v1325 = vld [vmem:[%s1314 + $0x28] sm:$0xf]
    %v1326 = vld [vmem:[%s1314 + $0x2c] sm:$0xf]
    %v1327 = vld [vmem:[%s1314 + $0x30] sm:$0xf]
    %v1328 = vld [vmem:[%s1314 + $0x34] sm:$0xf]
    %v1329 = vld [vmem:[%s1314 + $0x38] sm:$0xf]
    %v1330 = vld [vmem:[%s1314 + $0x3c] sm:$0xf]
    %v1347 = vunpack.c.l.b16 %v1315
    %v1348 = vunpack.c.l.b16 %v1316
    %v1349 = vunpack.c.l.b16 %v1317
    %v1350 = vunpack.c.l.b16 %v1318
    %v1351 = vunpack.c.l.b16 %v1319
    %v1352 = vunpack.c.l.b16 %v1320
    %v1353 = vunpack.c.l.b16 %v1321
    %v1354 = vunpack.c.l.b16 %v1322
    %v1355 = vunpack.c.l.b16 %v1323
    %v1356 = vunpack.c.l.b16 %v1324
    %v1357 = vunpack.c.l.b16 %v1325
    %v1358 = vunpack.c.l.b16 %v1326
    %v1359 = vunpack.c.l.b16 %v1327
    %v1360 = vunpack.c.l.b16 %v1328
    %v1361 = vunpack.c.l.b16 %v1329
    %v1362 = vunpack.c.l.b16 %v1330
    %v1363 = vpack.c.b16 %v1348, %v1347
    %v1364 = vpack.c.b16 %v1350, %v1349
    %v1365 = vpack.c.b16 %v1352, %v1351
    %v1366 = vpack.c.b16 %v1354, %v1353
    %v1367 = vpack.c.b16 %v1356, %v1355
    %v1368 = vpack.c.b16 %v1358, %v1357
    %v1369 = vpack.c.b16 %v1360, %v1359
    %v1370 = vpack.c.b16 %v1362, %v1361
    %1379 = vmatprep.subr.bf16.mxu0 0
    %1380 = vmatpush1.bf16.msra.mxu0 %v1370
    %1381 = vmatprep.subr.bf16.mxu0 0
    %1382 = vmatpush1.bf16.msra.mxu0 %v1369
    %1383 = vmatprep.subr.bf16.mxu0 0
    %1384 = vmatpush1.bf16.msra.mxu0 %v1368
    %1385 = vmatprep.subr.bf16.mxu0 0
    %1386 = vmatpush1.bf16.msra.mxu0 %v1367
    %1387 = vmatprep.subr.bf16.mxu0 0
    %1388 = vmatpush1.bf16.msra.mxu0 %v1366
    %1389 = vmatprep.subr.bf16.mxu0 0
    %1390 = vmatpush1.bf16.msra.mxu0 %v1365
    %1391 = vmatprep.subr.bf16.mxu0 0
    %1392 = vmatpush1.bf16.msra.mxu0 %v1364
    %1393 = vmatprep.subr.bf16.mxu0 0
    %1394 = vmatpush1.bf16.msra.mxu0 %v1363
    %1395 = vmatprep.subr.bf16.mxu0 0
    %1396 = vmatpush2.bf16.msra.mxu0 0
    %1397 = vmatprep.subr.bf16.mxu0 0
    %1398 = vmatpush2.bf16.msra.mxu0 0
    %1399 = vmatprep.subr.bf16.mxu0 0
    %1400 = vmatpush2.bf16.msra.mxu0 0
    %1401 = vmatprep.subr.bf16.mxu0 0
    %1402 = vmatpush2.bf16.msra.mxu0 0
    %1403 = vmatprep.subr.bf16.mxu0 0
    %1404 = vmatpush2.bf16.msra.mxu0 0
    %1405 = vmatprep.subr.bf16.mxu0 0
    %1406 = vmatpush2.bf16.msra.mxu0 0
    %1407 = vmatprep.subr.bf16.mxu0 0
    %1408 = vmatpush2.bf16.msra.mxu0 0
    %1409 = vmatprep.subr.bf16.mxu0 0
    %1410 = vmatpush2.bf16.msra.mxu0 0
    %1411 = vmatprep.mubr.bf16.mxu0 0
    %1412 = vmatmul.mubr.bf16.gmra.mxu0 %v81
    %v1413 = vpop.f32.mrf.mxu0
    %v1414 = vadd.f32 0.0, %v1413
    %v1415 = vpop.f32.mrf.mxu0
    %v1416 = vpop.f32.mrf.mxu0
    %v1417 = vadd.f32 0.0, %v1416
    %v1418 = vpop.f32.mrf.mxu0
    %1419 = vmatprep.mubr.bf16.mxu0 0
    %1420 = vmatmul.mubr.bf16.gmra.mxu0 %v82
    %v1421 = vpop.f32.mrf.mxu0
    %v1422 = vadd.f32 0.0, %v1421
    %v1423 = vpop.f32.mrf.mxu0
    %v1424 = vpop.f32.mrf.mxu0
    %v1425 = vadd.f32 0.0, %v1424
    %v1426 = vpop.f32.mrf.mxu0
    %1427 = vmatprep.mubr.bf16.mxu0 0
    %1428 = vmatmul.mubr.bf16.gmra.mxu0 %v83
    %v1429 = vpop.f32.mrf.mxu0
    %v1430 = vadd.f32 0.0, %v1429
    %v1431 = vpop.f32.mrf.mxu0
    %v1432 = vpop.f32.mrf.mxu0
    %v1433 = vadd.f32 0.0, %v1432
    %v1434 = vpop.f32.mrf.mxu0
    %1435 = vmatprep.mubr.bf16.mxu0 0
    %1436 = vmatmul.mubr.bf16.gmra.mxu0 %v84
    %v1437 = vpop.f32.mrf.mxu0
    %v1438 = vadd.f32 0.0, %v1437
    %v1439 = vpop.f32.mrf.mxu0
    %v1440 = vpop.f32.mrf.mxu0
    %v1441 = vadd.f32 0.0, %v1440
    %v1442 = vpop.f32.mrf.mxu0
    %1443 = vdwg.mxu0
    %v1444 = vmax.f32 %v1306, %v1414
    %v1445 = vmax.f32 %v1307, %v1417
    %v1446 = vmax.f32 %v1308, %v1422
    %v1447 = vmax.f32 %v1309, %v1425
    %v1448 = vmax.f32 %v1310, %v1430
    %v1449 = vmax.f32 %v1311, %v1433
    %v1450 = vmax.f32 %v1312, %v1438
    %v1451 = vmax.f32 %v1313, %v1441
    %s1452 = scalar_lea.vmem [#allocation5], 640
    %v1453 = vld [vmem:[%s1452] sm:$0xf]
    %v1454 = vld [vmem:[%s1452 + $0x4] sm:$0xf]
    %v1455 = vld [vmem:[%s1452 + $0x8] sm:$0xf]
    %v1456 = vld [vmem:[%s1452 + $0xc] sm:$0xf]
    %v1457 = vld [vmem:[%s1452 + $0x10] sm:$0xf]
    %v1458 = vld [vmem:[%s1452 + $0x14] sm:$0xf]
    %v1459 = vld [vmem:[%s1452 + $0x18] sm:$0xf]
    %v1460 = vld [vmem:[%s1452 + $0x1c] sm:$0xf]
    %v1461 = vld [vmem:[%s1452 + $0x20] sm:$0xf]
    %v1462 = vld [vmem:[%s1452 + $0x24] sm:$0xf]
    %v1463 = vld [vmem:[%s1452 + $0x28] sm:$0xf]
    %v1464 = vld [vmem:[%s1452 + $0x2c] sm:$0xf]
    %v1465 = vld [vmem:[%s1452 + $0x30] sm:$0xf]
    %v1466 = vld [vmem:[%s1452 + $0x34] sm:$0xf]
    %v1467 = vld [vmem:[%s1452 + $0x38] sm:$0xf]
    %v1468 = vld [vmem:[%s1452 + $0x3c] sm:$0xf]
    %v1485 = vunpack.c.l.b16 %v1453
    %v1486 = vunpack.c.l.b16 %v1454
    %v1487 = vunpack.c.l.b16 %v1455
    %v1488 = vunpack.c.l.b16 %v1456
    %v1489 = vunpack.c.l.b16 %v1457
    %v1490 = vunpack.c.l.b16 %v1458
    %v1491 = vunpack.c.l.b16 %v1459
    %v1492 = vunpack.c.l.b16 %v1460
    %v1493 = vunpack.c.l.b16 %v1461
    %v1494 = vunpack.c.l.b16 %v1462
    %v1495 = vunpack.c.l.b16 %v1463
    %v1496 = vunpack.c.l.b16 %v1464
    %v1497 = vunpack.c.l.b16 %v1465
    %v1498 = vunpack.c.l.b16 %v1466
    %v1499 = vunpack.c.l.b16 %v1467
    %v1500 = vunpack.c.l.b16 %v1468
    %v1501 = vpack.c.b16 %v1486, %v1485
    %v1502 = vpack.c.b16 %v1488, %v1487
    %v1503 = vpack.c.b16 %v1490, %v1489
    %v1504 = vpack.c.b16 %v1492, %v1491
    %v1505 = vpack.c.b16 %v1494, %v1493
    %v1506 = vpack.c.b16 %v1496, %v1495
    %v1507 = vpack.c.b16 %v1498, %v1497
    %v1508 = vpack.c.b16 %v1500, %v1499
    %1517 = vmatprep.subr.bf16.mxu0 0
    %1518 = vmatpush1.bf16.msra.mxu0 %v1508
    %1519 = vmatprep.subr.bf16.mxu0 0
    %1520 = vmatpush1.bf16.msra.mxu0 %v1507
    %1521 = vmatprep.subr.bf16.mxu0 0
    %1522 = vmatpush1.bf16.msra.mxu0 %v1506
    %1523 = vmatprep.subr.bf16.mxu0 0
    %1524 = vmatpush1.bf16.msra.mxu0 %v1505
    %1525 = vmatprep.subr.bf16.mxu0 0
    %1526 = vmatpush1.bf16.msra.mxu0 %v1504
    %1527 = vmatprep.subr.bf16.mxu0 0
    %1528 = vmatpush1.bf16.msra.mxu0 %v1503
    %1529 = vmatprep.subr.bf16.mxu0 0
    %1530 = vmatpush1.bf16.msra.mxu0 %v1502
    %1531 = vmatprep.subr.bf16.mxu0 0
    %1532 = vmatpush1.bf16.msra.mxu0 %v1501
    %1533 = vmatprep.subr.bf16.mxu0 0
    %1534 = vmatpush2.bf16.msra.mxu0 0
    %1535 = vmatprep.subr.bf16.mxu0 0
    %1536 = vmatpush2.bf16.msra.mxu0 0
    %1537 = vmatprep.subr.bf16.mxu0 0
    %1538 = vmatpush2.bf16.msra.mxu0 0
    %1539 = vmatprep.subr.bf16.mxu0 0
    %1540 = vmatpush2.bf16.msra.mxu0 0
    %1541 = vmatprep.subr.bf16.mxu0 0
    %1542 = vmatpush2.bf16.msra.mxu0 0
    %1543 = vmatprep.subr.bf16.mxu0 0
    %1544 = vmatpush2.bf16.msra.mxu0 0
    %1545 = vmatprep.subr.bf16.mxu0 0
    %1546 = vmatpush2.bf16.msra.mxu0 0
    %1547 = vmatprep.subr.bf16.mxu0 0
    %1548 = vmatpush2.bf16.msra.mxu0 0
    %1549 = vmatprep.mubr.bf16.mxu0 0
    %1550 = vmatmul.mubr.bf16.gmra.mxu0 %v81
    %v1551 = vpop.f32.mrf.mxu0
    %v1552 = vadd.f32 0.0, %v1551
    %v1553 = vpop.f32.mrf.mxu0
    %v1554 = vpop.f32.mrf.mxu0
    %v1555 = vadd.f32 0.0, %v1554
    %v1556 = vpop.f32.mrf.mxu0
    %1557 = vmatprep.mubr.bf16.mxu0 0
    %1558 = vmatmul.mubr.bf16.gmra.mxu0 %v82
    %v1559 = vpop.f32.mrf.mxu0
    %v1560 = vadd.f32 0.0, %v1559
    %v1561 = vpop.f32.mrf.mxu0
    %v1562 = vpop.f32.mrf.mxu0
    %v1563 = vadd.f32 0.0, %v1562
    %v1564 = vpop.f32.mrf.mxu0
    %1565 = vmatprep.mubr.bf16.mxu0 0
    %1566 = vmatmul.mubr.bf16.gmra.mxu0 %v83
    %v1567 = vpop.f32.mrf.mxu0
    %v1568 = vadd.f32 0.0, %v1567
    %v1569 = vpop.f32.mrf.mxu0
    %v1570 = vpop.f32.mrf.mxu0
    %v1571 = vadd.f32 0.0, %v1570
    %v1572 = vpop.f32.mrf.mxu0
    %1573 = vmatprep.mubr.bf16.mxu0 0
    %1574 = vmatmul.mubr.bf16.gmra.mxu0 %v84
    %v1575 = vpop.f32.mrf.mxu0
    %v1576 = vadd.f32 0.0, %v1575
    %v1577 = vpop.f32.mrf.mxu0
    %v1578 = vpop.f32.mrf.mxu0
    %v1579 = vadd.f32 0.0, %v1578
    %v1580 = vpop.f32.mrf.mxu0
    %1581 = vdwg.mxu0
    %v1582 = vmax.f32 %v1444, %v1552
    %v1583 = vmax.f32 %v1445, %v1555
    %v1584 = vmax.f32 %v1446, %v1560
    %v1585 = vmax.f32 %v1447, %v1563
    %v1586 = vmax.f32 %v1448, %v1568
    %v1587 = vmax.f32 %v1449, %v1571
    %v1588 = vmax.f32 %v1450, %v1576
    %v1589 = vmax.f32 %v1451, %v1579
    %s1590 = scalar_lea.vmem [#allocation5], 704
    %v1591 = vld [vmem:[%s1590] sm:$0xf]
    %v1592 = vld [vmem:[%s1590 + $0x4] sm:$0xf]
    %v1593 = vld [vmem:[%s1590 + $0x8] sm:$0xf]
    %v1594 = vld [vmem:[%s1590 + $0xc] sm:$0xf]
    %v1595 = vld [vmem:[%s1590 + $0x10] sm:$0xf]
    %v1596 = vld [vmem:[%s1590 + $0x14] sm:$0xf]
    %v1597 = vld [vmem:[%s1590 + $0x18] sm:$0xf]
    %v1598 = vld [vmem:[%s1590 + $0x1c] sm:$0xf]
    %v1599 = vld [vmem:[%s1590 + $0x20] sm:$0xf]
    %v1600 = vld [vmem:[%s1590 + $0x24] sm:$0xf]
    %v1601 = vld [vmem:[%s1590 + $0x28] sm:$0xf]
    %v1602 = vld [vmem:[%s1590 + $0x2c] sm:$0xf]
    %v1603 = vld [vmem:[%s1590 + $0x30] sm:$0xf]
    %v1604 = vld [vmem:[%s1590 + $0x34] sm:$0xf]
    %v1605 = vld [vmem:[%s1590 + $0x38] sm:$0xf]
    %v1606 = vld [vmem:[%s1590 + $0x3c] sm:$0xf]
    %v1623 = vunpack.c.l.b16 %v1591
    %v1624 = vunpack.c.l.b16 %v1592
    %v1625 = vunpack.c.l.b16 %v1593
    %v1626 = vunpack.c.l.b16 %v1594
    %v1627 = vunpack.c.l.b16 %v1595
    %v1628 = vunpack.c.l.b16 %v1596
    %v1629 = vunpack.c.l.b16 %v1597
    %v1630 = vunpack.c.l.b16 %v1598
    %v1631 = vunpack.c.l.b16 %v1599
    %v1632 = vunpack.c.l.b16 %v1600
    %v1633 = vunpack.c.l.b16 %v1601
    %v1634 = vunpack.c.l.b16 %v1602
    %v1635 = vunpack.c.l.b16 %v1603
    %v1636 = vunpack.c.l.b16 %v1604
    %v1637 = vunpack.c.l.b16 %v1605
    %v1638 = vunpack.c.l.b16 %v1606
    %v1639 = vpack.c.b16 %v1624, %v1623
    %v1640 = vpack.c.b16 %v1626, %v1625
    %v1641 = vpack.c.b16 %v1628, %v1627
    %v1642 = vpack.c.b16 %v1630, %v1629
    %v1643 = vpack.c.b16 %v1632, %v1631
    %v1644 = vpack.c.b16 %v1634, %v1633
    %v1645 = vpack.c.b16 %v1636, %v1635
    %v1646 = vpack.c.b16 %v1638, %v1637
    %1655 = vmatprep.subr.bf16.mxu0 0
    %1656 = vmatpush1.bf16.msra.mxu0 %v1646
    %1657 = vmatprep.subr.bf16.mxu0 0
    %1658 = vmatpush1.bf16.msra.mxu0 %v1645
    %1659 = vmatprep.subr.bf16.mxu0 0
    %1660 = vmatpush1.bf16.msra.mxu0 %v1644
    %1661 = vmatprep.subr.bf16.mxu0 0
    %1662 = vmatpush1.bf16.msra.mxu0 %v1643
    %1663 = vmatprep.subr.bf16.mxu0 0
    %1664 = vmatpush1.bf16.msra.mxu0 %v1642
    %1665 = vmatprep.subr.bf16.mxu0 0
    %1666 = vmatpush1.bf16.msra.mxu0 %v1641
    %1667 = vmatprep.subr.bf16.mxu0 0
    %1668 = vmatpush1.bf16.msra.mxu0 %v1640
    %1669 = vmatprep.subr.bf16.mxu0 0
    %1670 = vmatpush1.bf16.msra.mxu0 %v1639
    %1671 = vmatprep.subr.bf16.mxu0 0
    %1672 = vmatpush2.bf16.msra.mxu0 0
    %1673 = vmatprep.subr.bf16.mxu0 0
    %1674 = vmatpush2.bf16.msra.mxu0 0
    %1675 = vmatprep.subr.bf16.mxu0 0
    %1676 = vmatpush2.bf16.msra.mxu0 0
    %1677 = vmatprep.subr.bf16.mxu0 0
    %1678 = vmatpush2.bf16.msra.mxu0 0
    %1679 = vmatprep.subr.bf16.mxu0 0
    %1680 = vmatpush2.bf16.msra.mxu0 0
    %1681 = vmatprep.subr.bf16.mxu0 0
    %1682 = vmatpush2.bf16.msra.mxu0 0
    %1683 = vmatprep.subr.bf16.mxu0 0
    %1684 = vmatpush2.bf16.msra.mxu0 0
    %1685 = vmatprep.subr.bf16.mxu0 0
    %1686 = vmatpush2.bf16.msra.mxu0 0
    %1687 = vmatprep.mubr.bf16.mxu0 0
    %1688 = vmatmul.mubr.bf16.gmra.mxu0 %v81
    %v1689 = vpop.f32.mrf.mxu0
    %v1690 = vadd.f32 0.0, %v1689
    %v1691 = vpop.f32.mrf.mxu0
    %v1692 = vpop.f32.mrf.mxu0
    %v1693 = vadd.f32 0.0, %v1692
    %v1694 = vpop.f32.mrf.mxu0
    %1695 = vmatprep.mubr.bf16.mxu0 0
    %1696 = vmatmul.mubr.bf16.gmra.mxu0 %v82
    %v1697 = vpop.f32.mrf.mxu0
    %v1698 = vadd.f32 0.0, %v1697
    %v1699 = vpop.f32.mrf.mxu0
    %v1700 = vpop.f32.mrf.mxu0
    %v1701 = vadd.f32 0.0, %v1700
    %v1702 = vpop.f32.mrf.mxu0
    %1703 = vmatprep.mubr.bf16.mxu0 0
    %1704 = vmatmul.mubr.bf16.gmra.mxu0 %v83
    %v1705 = vpop.f32.mrf.mxu0
    %v1706 = vadd.f32 0.0, %v1705
    %v1707 = vpop.f32.mrf.mxu0
    %v1708 = vpop.f32.mrf.mxu0
    %v1709 = vadd.f32 0.0, %v1708
    %v1710 = vpop.f32.mrf.mxu0
    %1711 = vmatprep.mubr.bf16.mxu0 0
    %1712 = vmatmul.mubr.bf16.gmra.mxu0 %v84
    %v1713 = vpop.f32.mrf.mxu0
    %v1714 = vadd.f32 0.0, %v1713
    %v1715 = vpop.f32.mrf.mxu0
    %v1716 = vpop.f32.mrf.mxu0
    %v1717 = vadd.f32 0.0, %v1716
    %v1718 = vpop.f32.mrf.mxu0
    %1719 = vdwg.mxu0
    %v1720 = vmax.f32 %v1582, %v1690
    %v1721 = vmax.f32 %v1583, %v1693
    %v1722 = vmax.f32 %v1584, %v1698
    %v1723 = vmax.f32 %v1585, %v1701
    %v1724 = vmax.f32 %v1586, %v1706
    %v1725 = vmax.f32 %v1587, %v1709
    %v1726 = vmax.f32 %v1588, %v1714
    %v1727 = vmax.f32 %v1589, %v1717
    %s1728 = scalar_lea.vmem [#allocation5], 768
    %v1729 = vld [vmem:[%s1728] sm:$0xf]
    %v1730 = vld [vmem:[%s1728 + $0x4] sm:$0xf]
    %v1731 = vld [vmem:[%s1728 + $0x8] sm:$0xf]
    %v1732 = vld [vmem:[%s1728 + $0xc] sm:$0xf]
    %v1733 = vld [vmem:[%s1728 + $0x10] sm:$0xf]
    %v1734 = vld [vmem:[%s1728 + $0x14] sm:$0xf]
    %v1735 = vld [vmem:[%s1728 + $0x18] sm:$0xf]
    %v1736 = vld [vmem:[%s1728 + $0x1c] sm:$0xf]
    %v1737 = vld [vmem:[%s1728 + $0x20] sm:$0xf]
    %v1738 = vld [vmem:[%s1728 + $0x24] sm:$0xf]
    %v1739 = vld [vmem:[%s1728 + $0x28] sm:$0xf]
    %v1740 = vld [vmem:[%s1728 + $0x2c] sm:$0xf]
    %v1741 = vld [vmem:[%s1728 + $0x30] sm:$0xf]
    %v1742 = vld [vmem:[%s1728 + $0x34] sm:$0xf]
    %v1743 = vld [vmem:[%s1728 + $0x38] sm:$0xf]
    %v1744 = vld [vmem:[%s1728 + $0x3c] sm:$0xf]
    %v1761 = vunpack.c.l.b16 %v1729
    %v1762 = vunpack.c.l.b16 %v1730
    %v1763 = vunpack.c.l.b16 %v1731
    %v1764 = vunpack.c.l.b16 %v1732
    %v1765 = vunpack.c.l.b16 %v1733
    %v1766 = vunpack.c.l.b16 %v1734
    %v1767 = vunpack.c.l.b16 %v1735
    %v1768 = vunpack.c.l.b16 %v1736
    %v1769 = vunpack.c.l.b16 %v1737
    %v1770 = vunpack.c.l.b16 %v1738
    %v1771 = vunpack.c.l.b16 %v1739
    %v1772 = vunpack.c.l.b16 %v1740
    %v1773 = vunpack.c.l.b16 %v1741
    %v1774 = vunpack.c.l.b16 %v1742
    %v1775 = vunpack.c.l.b16 %v1743
    %v1776 = vunpack.c.l.b16 %v1744
    %v1777 = vpack.c.b16 %v1762, %v1761
    %v1778 = vpack.c.b16 %v1764, %v1763
    %v1779 = vpack.c.b16 %v1766, %v1765
    %v1780 = vpack.c.b16 %v1768, %v1767
    %v1781 = vpack.c.b16 %v1770, %v1769
    %v1782 = vpack.c.b16 %v1772, %v1771
    %v1783 = vpack.c.b16 %v1774, %v1773
    %v1784 = vpack.c.b16 %v1776, %v1775
    %1793 = vmatprep.subr.bf16.mxu0 0
    %1794 = vmatpush1.bf16.msra.mxu0 %v1784
    %1795 = vmatprep.subr.bf16.mxu0 0
    %1796 = vmatpush1.bf16.msra.mxu0 %v1783
    %1797 = vmatprep.subr.bf16.mxu0 0
    %1798 = vmatpush1.bf16.msra.mxu0 %v1782
    %1799 = vmatprep.subr.bf16.mxu0 0
    %1800 = vmatpush1.bf16.msra.mxu0 %v1781
    %1801 = vmatprep.subr.bf16.mxu0 0
    %1802 = vmatpush1.bf16.msra.mxu0 %v1780
    %1803 = vmatprep.subr.bf16.mxu0 0
    %1804 = vmatpush1.bf16.msra.mxu0 %v1779
    %1805 = vmatprep.subr.bf16.mxu0 0
    %1806 = vmatpush1.bf16.msra.mxu0 %v1778
    %1807 = vmatprep.subr.bf16.mxu0 0
    %1808 = vmatpush1.bf16.msra.mxu0 %v1777
    %1809 = vmatprep.subr.bf16.mxu0 0
    %1810 = vmatpush2.bf16.msra.mxu0 0
    %1811 = vmatprep.subr.bf16.mxu0 0
    %1812 = vmatpush2.bf16.msra.mxu0 0
    %1813 = vmatprep.subr.bf16.mxu0 0
    %1814 = vmatpush2.bf16.msra.mxu0 0
    %1815 = vmatprep.subr.bf16.mxu0 0
    %1816 = vmatpush2.bf16.msra.mxu0 0
    %1817 = vmatprep.subr.bf16.mxu0 0
    %1818 = vmatpush2.bf16.msra.mxu0 0
    %1819 = vmatprep.subr.bf16.mxu0 0
    %1820 = vmatpush2.bf16.msra.mxu0 0
    %1821 = vmatprep.subr.bf16.mxu0 0
    %1822 = vmatpush2.bf16.msra.mxu0 0
    %1823 = vmatprep.subr.bf16.mxu0 0
    %1824 = vmatpush2.bf16.msra.mxu0 0
    %1825 = vmatprep.mubr.bf16.mxu0 0
    %1826 = vmatmul.mubr.bf16.gmra.mxu0 %v81
    %v1827 = vpop.f32.mrf.mxu0
    %v1828 = vadd.f32 0.0, %v1827
    %v1829 = vpop.f32.mrf.mxu0
    %v1830 = vpop.f32.mrf.mxu0
    %v1831 = vadd.f32 0.0, %v1830
    %v1832 = vpop.f32.mrf.mxu0
    %1833 = vmatprep.mubr.bf16.mxu0 0
    %1834 = vmatmul.mubr.bf16.gmra.mxu0 %v82
    %v1835 = vpop.f32.mrf.mxu0
    %v1836 = vadd.f32 0.0, %v1835
    %v1837 = vpop.f32.mrf.mxu0
    %v1838 = vpop.f32.mrf.mxu0
    %v1839 = vadd.f32 0.0, %v1838
    %v1840 = vpop.f32.mrf.mxu0
    %1841 = vmatprep.mubr.bf16.mxu0 0
    %1842 = vmatmul.mubr.bf16.gmra.mxu0 %v83
    %v1843 = vpop.f32.mrf.mxu0
    %v1844 = vadd.f32 0.0, %v1843
    %v1845 = vpop.f32.mrf.mxu0
    %v1846 = vpop.f32.mrf.mxu0
    %v1847 = vadd.f32 0.0, %v1846
    %v1848 = vpop.f32.mrf.mxu0
    %1849 = vmatprep.mubr.bf16.mxu0 0
    %1850 = vmatmul.mubr.bf16.gmra.mxu0 %v84
    %v1851 = vpop.f32.mrf.mxu0
    %v1852 = vadd.f32 0.0, %v1851
    %v1853 = vpop.f32.mrf.mxu0
    %v1854 = vpop.f32.mrf.mxu0
    %v1855 = vadd.f32 0.0, %v1854
    %v1856 = vpop.f32.mrf.mxu0
    %1857 = vdwg.mxu0
    %v1858 = vmax.f32 %v1720, %v1828
    %v1859 = vmax.f32 %v1721, %v1831
    %v1860 = vmax.f32 %v1722, %v1836
    %v1861 = vmax.f32 %v1723, %v1839
    %v1862 = vmax.f32 %v1724, %v1844
    %v1863 = vmax.f32 %v1725, %v1847
    %v1864 = vmax.f32 %v1726, %v1852
    %v1865 = vmax.f32 %v1727, %v1855
    %s1866 = scalar_lea.vmem [#allocation5], 832
    %v1867 = vld [vmem:[%s1866] sm:$0xf]
    %v1868 = vld [vmem:[%s1866 + $0x4] sm:$0xf]
    %v1869 = vld [vmem:[%s1866 + $0x8] sm:$0xf]
    %v1870 = vld [vmem:[%s1866 + $0xc] sm:$0xf]
    %v1871 = vld [vmem:[%s1866 + $0x10] sm:$0xf]
    %v1872 = vld [vmem:[%s1866 + $0x14] sm:$0xf]
    %v1873 = vld [vmem:[%s1866 + $0x18] sm:$0xf]
    %v1874 = vld [vmem:[%s1866 + $0x1c] sm:$0xf]
    %v1875 = vld [vmem:[%s1866 + $0x20] sm:$0xf]
    %v1876 = vld [vmem:[%s1866 + $0x24] sm:$0xf]
    %v1877 = vld [vmem:[%s1866 + $0x28] sm:$0xf]
    %v1878 = vld [vmem:[%s1866 + $0x2c] sm:$0xf]
    %v1879 = vld [vmem:[%s1866 + $0x30] sm:$0xf]
    %v1880 = vld [vmem:[%s1866 + $0x34] sm:$0xf]
    %v1881 = vld [vmem:[%s1866 + $0x38] sm:$0xf]
    %v1882 = vld [vmem:[%s1866 + $0x3c] sm:$0xf]
    %v1899 = vunpack.c.l.b16 %v1867
    %v1900 = vunpack.c.l.b16 %v1868
    %v1901 = vunpack.c.l.b16 %v1869
    %v1902 = vunpack.c.l.b16 %v1870
    %v1903 = vunpack.c.l.b16 %v1871
    %v1904 = vunpack.c.l.b16 %v1872
    %v1905 = vunpack.c.l.b16 %v1873
    %v1906 = vunpack.c.l.b16 %v1874
    %v1907 = vunpack.c.l.b16 %v1875
    %v1908 = vunpack.c.l.b16 %v1876
    %v1909 = vunpack.c.l.b16 %v1877
    %v1910 = vunpack.c.l.b16 %v1878
    %v1911 = vunpack.c.l.b16 %v1879
    %v1912 = vunpack.c.l.b16 %v1880
    %v1913 = vunpack.c.l.b16 %v1881
    %v1914 = vunpack.c.l.b16 %v1882
    %v1915 = vpack.c.b16 %v1900, %v1899
    %v1916 = vpack.c.b16 %v1902, %v1901
    %v1917 = vpack.c.b16 %v1904, %v1903
    %v1918 = vpack.c.b16 %v1906, %v1905
    %v1919 = vpack.c.b16 %v1908, %v1907
    %v1920 = vpack.c.b16 %v1910, %v1909
    %v1921 = vpack.c.b16 %v1912, %v1911
    %v1922 = vpack.c.b16 %v1914, %v1913
    %1931 = vmatprep.subr.bf16.mxu0 0
    %1932 = vmatpush1.bf16.msra.mxu0 %v1922
    %1933 = vmatprep.subr.bf16.mxu0 0
    %1934 = vmatpush1.bf16.msra.mxu0 %v1921
    %1935 = vmatprep.subr.bf16.mxu0 0
    %1936 = vmatpush1.bf16.msra.mxu0 %v1920
    %1937 = vmatprep.subr.bf16.mxu0 0
    %1938 = vmatpush1.bf16.msra.mxu0 %v1919
    %1939 = vmatprep.subr.bf16.mxu0 0
    %1940 = vmatpush1.bf16.msra.mxu0 %v1918
    %1941 = vmatprep.subr.bf16.mxu0 0
    %1942 = vmatpush1.bf16.msra.mxu0 %v1917
    %1943 = vmatprep.subr.bf16.mxu0 0
    %1944 = vmatpush1.bf16.msra.mxu0 %v1916
    %1945 = vmatprep.subr.bf16.mxu0 0
    %1946 = vmatpush1.bf16.msra.mxu0 %v1915
    %1947 = vmatprep.subr.bf16.mxu0 0
    %1948 = vmatpush2.bf16.msra.mxu0 0
    %1949 = vmatprep.subr.bf16.mxu0 0
    %1950 = vmatpush2.bf16.msra.mxu0 0
    %1951 = vmatprep.subr.bf16.mxu0 0
    %1952 = vmatpush2.bf16.msra.mxu0 0
    %1953 = vmatprep.subr.bf16.mxu0 0
    %1954 = vmatpush2.bf16.msra.mxu0 0
    %1955 = vmatprep.subr.bf16.mxu0 0
    %1956 = vmatpush2.bf16.msra.mxu0 0
    %1957 = vmatprep.subr.bf16.mxu0 0
    %1958 = vmatpush2.bf16.msra.mxu0 0
    %1959 = vmatprep.subr.bf16.mxu0 0
    %1960 = vmatpush2.bf16.msra.mxu0 0
    %1961 = vmatprep.subr.bf16.mxu0 0
    %1962 = vmatpush2.bf16.msra.mxu0 0
    %1963 = vmatprep.mubr.bf16.mxu0 0
    %1964 = vmatmul.mubr.bf16.gmra.mxu0 %v81
    %v1965 = vpop.f32.mrf.mxu0
    %v1966 = vadd.f32 0.0, %v1965
    %v1967 = vpop.f32.mrf.mxu0
    %v1968 = vpop.f32.mrf.mxu0
    %v1969 = vadd.f32 0.0, %v1968
    %v1970 = vpop.f32.mrf.mxu0
    %1971 = vmatprep.mubr.bf16.mxu0 0
    %1972 = vmatmul.mubr.bf16.gmra.mxu0 %v82
    %v1973 = vpop.f32.mrf.mxu0
    %v1974 = vadd.f32 0.0, %v1973
    %v1975 = vpop.f32.mrf.mxu0
    %v1976 = vpop.f32.mrf.mxu0
    %v1977 = vadd.f32 0.0, %v1976
    %v1978 = vpop.f32.mrf.mxu0
    %1979 = vmatprep.mubr.bf16.mxu0 0
    %1980 = vmatmul.mubr.bf16.gmra.mxu0 %v83
    %v1981 = vpop.f32.mrf.mxu0
    %v1982 = vadd.f32 0.0, %v1981
    %v1983 = vpop.f32.mrf.mxu0
    %v1984 = vpop.f32.mrf.mxu0
    %v1985 = vadd.f32 0.0, %v1984
    %v1986 = vpop.f32.mrf.mxu0
    %1987 = vmatprep.mubr.bf16.mxu0 0
    %1988 = vmatmul.mubr.bf16.gmra.mxu0 %v84
    %v1989 = vpop.f32.mrf.mxu0
    %v1990 = vadd.f32 0.0, %v1989
    %v1991 = vpop.f32.mrf.mxu0
    %v1992 = vpop.f32.mrf.mxu0
    %v1993 = vadd.f32 0.0, %v1992
    %v1994 = vpop.f32.mrf.mxu0
    %1995 = vdwg.mxu0
    %v1996 = vmax.f32 %v1858, %v1966
    %v1997 = vmax.f32 %v1859, %v1969
    %v1998 = vmax.f32 %v1860, %v1974
    %v1999 = vmax.f32 %v1861, %v1977
    %v2000 = vmax.f32 %v1862, %v1982
    %v2001 = vmax.f32 %v1863, %v1985
    %v2002 = vmax.f32 %v1864, %v1990
    %v2003 = vmax.f32 %v1865, %v1993
    %s2004 = scalar_lea.vmem [#allocation5], 896
    %v2005 = vld [vmem:[%s2004] sm:$0xf]
    %v2006 = vld [vmem:[%s2004 + $0x4] sm:$0xf]
    %v2007 = vld [vmem:[%s2004 + $0x8] sm:$0xf]
    %v2008 = vld [vmem:[%s2004 + $0xc] sm:$0xf]
    %v2009 = vld [vmem:[%s2004 + $0x10] sm:$0xf]
    %v2010 = vld [vmem:[%s2004 + $0x14] sm:$0xf]
    %v2011 = vld [vmem:[%s2004 + $0x18] sm:$0xf]
    %v2012 = vld [vmem:[%s2004 + $0x1c] sm:$0xf]
    %v2013 = vld [vmem:[%s2004 + $0x20] sm:$0xf]
    %v2014 = vld [vmem:[%s2004 + $0x24] sm:$0xf]
    %v2015 = vld [vmem:[%s2004 + $0x28] sm:$0xf]
    %v2016 = vld [vmem:[%s2004 + $0x2c] sm:$0xf]
    %v2017 = vld [vmem:[%s2004 + $0x30] sm:$0xf]
    %v2018 = vld [vmem:[%s2004 + $0x34] sm:$0xf]
    %v2019 = vld [vmem:[%s2004 + $0x38] sm:$0xf]
    %v2020 = vld [vmem:[%s2004 + $0x3c] sm:$0xf]
    %v2037 = vunpack.c.l.b16 %v2005
    %v2038 = vunpack.c.l.b16 %v2006
    %v2039 = vunpack.c.l.b16 %v2007
    %v2040 = vunpack.c.l.b16 %v2008
    %v2041 = vunpack.c.l.b16 %v2009
    %v2042 = vunpack.c.l.b16 %v2010
    %v2043 = vunpack.c.l.b16 %v2011
    %v2044 = vunpack.c.l.b16 %v2012
    %v2045 = vunpack.c.l.b16 %v2013
    %v2046 = vunpack.c.l.b16 %v2014
    %v2047 = vunpack.c.l.b16 %v2015
    %v2048 = vunpack.c.l.b16 %v2016
    %v2049 = vunpack.c.l.b16 %v2017
    %v2050 = vunpack.c.l.b16 %v2018
    %v2051 = vunpack.c.l.b16 %v2019
    %v2052 = vunpack.c.l.b16 %v2020
    %v2053 = vpack.c.b16 %v2038, %v2037
    %v2054 = vpack.c.b16 %v2040, %v2039
    %v2055 = vpack.c.b16 %v2042, %v2041
    %v2056 = vpack.c.b16 %v2044, %v2043
    %v2057 = vpack.c.b16 %v2046, %v2045
    %v2058 = vpack.c.b16 %v2048, %v2047
    %v2059 = vpack.c.b16 %v2050, %v2049
    %v2060 = vpack.c.b16 %v2052, %v2051
    %2069 = vmatprep.subr.bf16.mxu0 0
    %2070 = vmatpush1.bf16.msra.mxu0 %v2060
    %2071 = vmatprep.subr.bf16.mxu0 0
    %2072 = vmatpush1.bf16.msra.mxu0 %v2059
    %2073 = vmatprep.subr.bf16.mxu0 0
    %2074 = vmatpush1.bf16.msra.mxu0 %v2058
    %2075 = vmatprep.subr.bf16.mxu0 0
    %2076 = vmatpush1.bf16.msra.mxu0 %v2057
    %2077 = vmatprep.subr.bf16.mxu0 0
    %2078 = vmatpush1.bf16.msra.mxu0 %v2056
    %2079 = vmatprep.subr.bf16.mxu0 0
    %2080 = vmatpush1.bf16.msra.mxu0 %v2055
    %2081 = vmatprep.subr.bf16.mxu0 0
    %2082 = vmatpush1.bf16.msra.mxu0 %v2054
    %2083 = vmatprep.subr.bf16.mxu0 0
    %2084 = vmatpush1.bf16.msra.mxu0 %v2053
    %2085 = vmatprep.subr.bf16.mxu0 0
    %2086 = vmatpush2.bf16.msra.mxu0 0
    %2087 = vmatprep.subr.bf16.mxu0 0
    %2088 = vmatpush2.bf16.msra.mxu0 0
    %2089 = vmatprep.subr.bf16.mxu0 0
    %2090 = vmatpush2.bf16.msra.mxu0 0
    %2091 = vmatprep.subr.bf16.mxu0 0
    %2092 = vmatpush2.bf16.msra.mxu0 0
    %2093 = vmatprep.subr.bf16.mxu0 0
    %2094 = vmatpush2.bf16.msra.mxu0 0
    %2095 = vmatprep.subr.bf16.mxu0 0
    %2096 = vmatpush2.bf16.msra.mxu0 0
    %2097 = vmatprep.subr.bf16.mxu0 0
    %2098 = vmatpush2.bf16.msra.mxu0 0
    %2099 = vmatprep.subr.bf16.mxu0 0
    %2100 = vmatpush2.bf16.msra.mxu0 0
    %2101 = vmatprep.mubr.bf16.mxu0 0
    %2102 = vmatmul.mubr.bf16.gmra.mxu0 %v81
    %v2103 = vpop.f32.mrf.mxu0
    %v2104 = vadd.f32 0.0, %v2103
    %v2105 = vpop.f32.mrf.mxu0
    %v2106 = vpop.f32.mrf.mxu0
    %v2107 = vadd.f32 0.0, %v2106
    %v2108 = vpop.f32.mrf.mxu0
    %2109 = vmatprep.mubr.bf16.mxu0 0
    %2110 = vmatmul.mubr.bf16.gmra.mxu0 %v82
    %v2111 = vpop.f32.mrf.mxu0
    %v2112 = vadd.f32 0.0, %v2111
    %v2113 = vpop.f32.mrf.mxu0
    %v2114 = vpop.f32.mrf.mxu0
    %v2115 = vadd.f32 0.0, %v2114
    %v2116 = vpop.f32.mrf.mxu0
    %2117 = vmatprep.mubr.bf16.mxu0 0
    %2118 = vmatmul.mubr.bf16.gmra.mxu0 %v83
    %v2119 = vpop.f32.mrf.mxu0
    %v2120 = vadd.f32 0.0, %v2119
    %v2121 = vpop.f32.mrf.mxu0
    %v2122 = vpop.f32.mrf.mxu0
    %v2123 = vadd.f32 0.0, %v2122
    %v2124 = vpop.f32.mrf.mxu0
    %2125 = vmatprep.mubr.bf16.mxu0 0
    %2126 = vmatmul.mubr.bf16.gmra.mxu0 %v84
    %v2127 = vpop.f32.mrf.mxu0
    %v2128 = vadd.f32 0.0, %v2127
    %v2129 = vpop.f32.mrf.mxu0
    %v2130 = vpop.f32.mrf.mxu0
    %v2131 = vadd.f32 0.0, %v2130
    %v2132 = vpop.f32.mrf.mxu0
    %2133 = vdwg.mxu0
    %v2134 = vmax.f32 %v1996, %v2104
    %v2135 = vmax.f32 %v1997, %v2107
    %v2136 = vmax.f32 %v1998, %v2112
    %v2137 = vmax.f32 %v1999, %v2115
    %v2138 = vmax.f32 %v2000, %v2120
    %v2139 = vmax.f32 %v2001, %v2123
    %v2140 = vmax.f32 %v2002, %v2128
    %v2141 = vmax.f32 %v2003, %v2131
    %s2142 = scalar_lea.vmem [#allocation5], 960
    %v2143 = vld [vmem:[%s2142] sm:$0xf]
    %v2144 = vld [vmem:[%s2142 + $0x4] sm:$0xf]
    %v2145 = vld [vmem:[%s2142 + $0x8] sm:$0xf]
    %v2146 = vld [vmem:[%s2142 + $0xc] sm:$0xf]
    %v2147 = vld [vmem:[%s2142 + $0x10] sm:$0xf]
    %v2148 = vld [vmem:[%s2142 + $0x14] sm:$0xf]
    %v2149 = vld [vmem:[%s2142 + $0x18] sm:$0xf]
    %v2150 = vld [vmem:[%s2142 + $0x1c] sm:$0xf]
    %v2151 = vld [vmem:[%s2142 + $0x20] sm:$0xf]
    %v2152 = vld [vmem:[%s2142 + $0x24] sm:$0xf]
    %v2153 = vld [vmem:[%s2142 + $0x28] sm:$0xf]
    %v2154 = vld [vmem:[%s2142 + $0x2c] sm:$0xf]
    %v2155 = vld [vmem:[%s2142 + $0x30] sm:$0xf]
    %v2156 = vld [vmem:[%s2142 + $0x34] sm:$0xf]
    %v2157 = vld [vmem:[%s2142 + $0x38] sm:$0xf]
    %v2158 = vld [vmem:[%s2142 + $0x3c] sm:$0xf]
    %v2175 = vunpack.c.l.b16 %v2143
    %v2176 = vunpack.c.l.b16 %v2144
    %v2177 = vunpack.c.l.b16 %v2145
    %v2178 = vunpack.c.l.b16 %v2146
    %v2179 = vunpack.c.l.b16 %v2147
    %v2180 = vunpack.c.l.b16 %v2148
    %v2181 = vunpack.c.l.b16 %v2149
    %v2182 = vunpack.c.l.b16 %v2150
    %v2183 = vunpack.c.l.b16 %v2151
    %v2184 = vunpack.c.l.b16 %v2152
    %v2185 = vunpack.c.l.b16 %v2153
    %v2186 = vunpack.c.l.b16 %v2154
    %v2187 = vunpack.c.l.b16 %v2155
    %v2188 = vunpack.c.l.b16 %v2156
    %v2189 = vunpack.c.l.b16 %v2157
    %v2190 = vunpack.c.l.b16 %v2158
    %v2191 = vpack.c.b16 %v2176, %v2175
    %v2192 = vpack.c.b16 %v2178, %v2177
    %v2193 = vpack.c.b16 %v2180, %v2179
    %v2194 = vpack.c.b16 %v2182, %v2181
    %v2195 = vpack.c.b16 %v2184, %v2183
    %v2196 = vpack.c.b16 %v2186, %v2185
    %v2197 = vpack.c.b16 %v2188, %v2187
    %v2198 = vpack.c.b16 %v2190, %v2189
    %2207 = vmatprep.subr.bf16.mxu0 0
    %2208 = vmatpush1.bf16.msra.mxu0 %v2198
    %2209 = vmatprep.subr.bf16.mxu0 0
    %2210 = vmatpush1.bf16.msra.mxu0 %v2197
    %2211 = vmatprep.subr.bf16.mxu0 0
    %2212 = vmatpush1.bf16.msra.mxu0 %v2196
    %2213 = vmatprep.subr.bf16.mxu0 0
    %2214 = vmatpush1.bf16.msra.mxu0 %v2195
    %2215 = vmatprep.subr.bf16.mxu0 0
    %2216 = vmatpush1.bf16.msra.mxu0 %v2194
    %2217 = vmatprep.subr.bf16.mxu0 0
    %2218 = vmatpush1.bf16.msra.mxu0 %v2193
    %2219 = vmatprep.subr.bf16.mxu0 0
    %2220 = vmatpush1.bf16.msra.mxu0 %v2192
    %2221 = vmatprep.subr.bf16.mxu0 0
    %2222 = vmatpush1.bf16.msra.mxu0 %v2191
    %2223 = vmatprep.subr.bf16.mxu0 0
    %2224 = vmatpush2.bf16.msra.mxu0 0
    %2225 = vmatprep.subr.bf16.mxu0 0
    %2226 = vmatpush2.bf16.msra.mxu0 0
    %2227 = vmatprep.subr.bf16.mxu0 0
    %2228 = vmatpush2.bf16.msra.mxu0 0
    %2229 = vmatprep.subr.bf16.mxu0 0
    %2230 = vmatpush2.bf16.msra.mxu0 0
    %2231 = vmatprep.subr.bf16.mxu0 0
    %2232 = vmatpush2.bf16.msra.mxu0 0
    %2233 = vmatprep.subr.bf16.mxu0 0
    %2234 = vmatpush2.bf16.msra.mxu0 0
    %2235 = vmatprep.subr.bf16.mxu0 0
    %2236 = vmatpush2.bf16.msra.mxu0 0
    %2237 = vmatprep.subr.bf16.mxu0 0
    %2238 = vmatpush2.bf16.msra.mxu0 0
    %2239 = vmatprep.mubr.bf16.mxu0 0
    %2240 = vmatmul.mubr.bf16.gmra.mxu0 %v81
    %v2241 = vpop.f32.mrf.mxu0
    %v2242 = vadd.f32 0.0, %v2241
    %v2243 = vpop.f32.mrf.mxu0
    %v2244 = vpop.f32.mrf.mxu0
    %v2245 = vadd.f32 0.0, %v2244
    %v2246 = vpop.f32.mrf.mxu0
    %2247 = vmatprep.mubr.bf16.mxu0 0
    %2248 = vmatmul.mubr.bf16.gmra.mxu0 %v82
    %v2249 = vpop.f32.mrf.mxu0
    %v2250 = vadd.f32 0.0, %v2249
    %v2251 = vpop.f32.mrf.mxu0
    %v2252 = vpop.f32.mrf.mxu0
    %v2253 = vadd.f32 0.0, %v2252
    %v2254 = vpop.f32.mrf.mxu0
    %2255 = vmatprep.mubr.bf16.mxu0 0
    %2256 = vmatmul.mubr.bf16.gmra.mxu0 %v83
    %v2257 = vpop.f32.mrf.mxu0
    %v2258 = vadd.f32 0.0, %v2257
    %v2259 = vpop.f32.mrf.mxu0
    %v2260 = vpop.f32.mrf.mxu0
    %v2261 = vadd.f32 0.0, %v2260
    %v2262 = vpop.f32.mrf.mxu0
    %2263 = vmatprep.mubr.bf16.mxu0 0
    %2264 = vmatmul.mubr.bf16.gmra.mxu0 %v84
    %v2265 = vpop.f32.mrf.mxu0
    %v2266 = vadd.f32 0.0, %v2265
    %v2267 = vpop.f32.mrf.mxu0
    %v2268 = vpop.f32.mrf.mxu0
    %v2269 = vadd.f32 0.0, %v2268
    %v2270 = vpop.f32.mrf.mxu0
    %2271 = vdwg.mxu0
    %v2272 = vmax.f32 %v2134, %v2242
    %v2273 = vmax.f32 %v2135, %v2245
    %v2274 = vmax.f32 %v2136, %v2250
    %v2275 = vmax.f32 %v2137, %v2253
    %v2276 = vmax.f32 %v2138, %v2258
    %v2277 = vmax.f32 %v2139, %v2261
    %v2278 = vmax.f32 %v2140, %v2266
    %v2279 = vmax.f32 %v2141, %v2269
    %v2280 = vadd.f32 %v2272, 1.0
    %v2281 = vlog2.pop %v2280
    %v2282 = vmul.f32 %v2281, 0.6931472
    %v2283 = vmul.f32 -0.5, %v2272
    %v2284 = vadd.f32 %v2283, 1.0
    %v2285 = vmul.f32 %v2284, %v2272
    %v2286 = vand.u32 2147483647, %v2272
    %vm2287 = vcmp.lt.f32.partialorder %v2286, 0.0004427343
    %v2288 = vsel %vm2287, %v2285, %v2282
    %v2289 = vadd.f32 %v2273, 1.0
    %v2290 = vlog2.pop %v2289
    %v2291 = vmul.f32 %v2290, 0.6931472
    %v2292 = vmul.f32 -0.5, %v2273
    %v2293 = vadd.f32 %v2292, 1.0
    %v2294 = vmul.f32 %v2293, %v2273
    %v2295 = vand.u32 2147483647, %v2273
    %vm2296 = vcmp.lt.f32.partialorder %v2295, 0.0004427343
    %v2297 = vsel %vm2296, %v2294, %v2291
    %v2298 = vadd.f32 %v2274, 1.0
    %v2299 = vlog2.pop %v2298
    %v2300 = vmul.f32 %v2299, 0.6931472
    %v2301 = vmul.f32 -0.5, %v2274
    %v2302 = vadd.f32 %v2301, 1.0
    %v2303 = vmul.f32 %v2302, %v2274
    %v2304 = vand.u32 2147483647, %v2274
    %vm2305 = vcmp.lt.f32.partialorder %v2304, 0.0004427343
    %v2306 = vsel %vm2305, %v2303, %v2300
    %v2307 = vadd.f32 %v2275, 1.0
    %v2308 = vlog2.pop %v2307
    %v2309 = vmul.f32 %v2308, 0.6931472
    %v2310 = vmul.f32 -0.5, %v2275
    %v2311 = vadd.f32 %v2310, 1.0
    %v2312 = vmul.f32 %v2311, %v2275
    %v2313 = vand.u32 2147483647, %v2275
    %vm2314 = vcmp.lt.f32.partialorder %v2313, 0.0004427343
    %v2315 = vsel %vm2314, %v2312, %v2309
    %v2316 = vadd.f32 %v2276, 1.0
    %v2317 = vlog2.pop %v2316
    %v2318 = vmul.f32 %v2317, 0.6931472
    %v2319 = vmul.f32 -0.5, %v2276
    %v2320 = vadd.f32 %v2319, 1.0
    %v2321 = vmul.f32 %v2320, %v2276
    %v2322 = vand.u32 2147483647, %v2276
    %vm2323 = vcmp.lt.f32.partialorder %v2322, 0.0004427343
    %v2324 = vsel %vm2323, %v2321, %v2318
    %v2325 = vadd.f32 %v2277, 1.0
    %v2326 = vlog2.pop %v2325
    %v2327 = vmul.f32 %v2326, 0.6931472
    %v2328 = vmul.f32 -0.5, %v2277
    %v2329 = vadd.f32 %v2328, 1.0
    %v2330 = vmul.f32 %v2329, %v2277
    %v2331 = vand.u32 2147483647, %v2277
    %vm2332 = vcmp.lt.f32.partialorder %v2331, 0.0004427343
    %v2333 = vsel %vm2332, %v2330, %v2327
    %v2334 = vadd.f32 %v2278, 1.0
    %v2335 = vlog2.pop %v2334
    %v2336 = vmul.f32 %v2335, 0.6931472
    %v2337 = vmul.f32 -0.5, %v2278
    %v2338 = vadd.f32 %v2337, 1.0
    %v2339 = vmul.f32 %v2338, %v2278
    %v2340 = vand.u32 2147483647, %v2278
    %vm2341 = vcmp.lt.f32.partialorder %v2340, 0.0004427343
    %v2342 = vsel %vm2341, %v2339, %v2336
    %v2343 = vadd.f32 %v2279, 1.0
    %v2344 = vlog2.pop %v2343
    %v2345 = vmul.f32 %v2344, 0.6931472
    %v2346 = vmul.f32 -0.5, %v2279
    %v2347 = vadd.f32 %v2346, 1.0
    %v2348 = vmul.f32 %v2347, %v2279
    %v2349 = vand.u32 2147483647, %v2279
    %vm2350 = vcmp.lt.f32.partialorder %v2349, 0.0004427343
    %v2351 = vsel %vm2350, %v2348, %v2345
    %v2352 = vrot.slane %v2288, 4
    %v2353 = vadd.f32 %v2288, %v2352
    %v2354 = vrot.slane %v2353, 2
    %v2355 = vadd.f32 %v2353, %v2354
    %v2356 = vrot.slane %v2355, 1
    %v2357 = vadd.f32 %v2355, %v2356
    %v2358 = vrot.slane %v2297, 4
    %v2359 = vadd.f32 %v2297, %v2358
    %v2360 = vrot.slane %v2359, 2
    %v2361 = vadd.f32 %v2359, %v2360
    %v2362 = vrot.slane %v2361, 1
    %v2363 = vadd.f32 %v2361, %v2362
    %v2364 = vrot.slane %v2306, 4
    %v2365 = vadd.f32 %v2306, %v2364
    %v2366 = vrot.slane %v2365, 2
    %v2367 = vadd.f32 %v2365, %v2366
    %v2368 = vrot.slane %v2367, 1
    %v2369 = vadd.f32 %v2367, %v2368
    %v2370 = vrot.slane %v2315, 4
    %v2371 = vadd.f32 %v2315, %v2370
    %v2372 = vrot.slane %v2371, 2
    %v2373 = vadd.f32 %v2371, %v2372
    %v2374 = vrot.slane %v2373, 1
    %v2375 = vadd.f32 %v2373, %v2374
    %v2376 = vrot.slane %v2324, 4
    %v2377 = vadd.f32 %v2324, %v2376
    %v2378 = vrot.slane %v2377, 2
    %v2379 = vadd.f32 %v2377, %v2378
    %v2380 = vrot.slane %v2379, 1
    %v2381 = vadd.f32 %v2379, %v2380
    %v2382 = vrot.slane %v2333, 4
    %v2383 = vadd.f32 %v2333, %v2382
    %v2384 = vrot.slane %v2383, 2
    %v2385 = vadd.f32 %v2383, %v2384
    %v2386 = vrot.slane %v2385, 1
    %v2387 = vadd.f32 %v2385, %v2386
    %v2388 = vrot.slane %v2342, 4
    %v2389 = vadd.f32 %v2342, %v2388
    %v2390 = vrot.slane %v2389, 2
    %v2391 = vadd.f32 %v2389, %v2390
    %v2392 = vrot.slane %v2391, 1
    %v2393 = vadd.f32 %v2391, %v2392
    %v2394 = vrot.slane %v2351, 4
    %v2395 = vadd.f32 %v2351, %v2394
    %v2396 = vrot.slane %v2395, 2
    %v2397 = vadd.f32 %v2395, %v2396
    %v2398 = vrot.slane %v2397, 1
    %v2399 = vadd.f32 %v2397, %v2398
    %vm2408 = vcmask 1041409
    %v2409 = vsel %vm2408, %v2363, %v2357
    %vm2410 = vcmask 1042434
    %v2411 = vsel %vm2410, %v2369, %v2409
    %vm2412 = vcmask 1043459
    %v2413 = vsel %vm2412, %v2375, %v2411
    %vm2414 = vcmask 1044484
    %v2415 = vsel %vm2414, %v2381, %v2413
    %vm2416 = vcmask 1045509
    %v2417 = vsel %vm2416, %v2387, %v2415
    %vm2418 = vcmask 1046534
    %v2419 = vsel %vm2418, %v2393, %v2417
    %vm2420 = vcmask 1047559
    %v2421 = vsel %vm2420, %v2399, %v2419
    %2423 = vst [vmem:[#allocation7] sm:$0xff] %v2421
    // Predicated region
    $region18: #{tpu_custom_call.1} parent=1 // pred_check
      _
    $region19: #{tpu_custom_call.1} parent=1 // pred_check_branch
      %2425 = sbr.rel (0) target = $region21
    $region20: #{tpu_custom_call.1} parent=1 // pred_region
      %s2427 = ssub.s32 128, 128
      %2428 = vsyncadd [#allocation4], %s2427
      %s2430 = sshll.u32 [#allocation7], 4
      %s2431 = int_to_ptr.vmem [resolvable:$true] %s2430
      %2433 = dma.vmem_to_hbm [thread:$0]  %s2431, 128, %s2, [#allocation4]
    $region21: #{tpu_custom_call.1} parent=1 // pred_fallthru
      _
    // Predicated region
    $region22: #{tpu_custom_call.1} parent=1 // pred_check
      _
    $region23: #{tpu_custom_call.1} parent=1 // pred_check_branch
      %2435 = sbr.rel (0) target = $region25
    $region24: #{tpu_custom_call.1} parent=1 // pred_region
      %2436 = dma.done [#allocation4], 128
    $region25: #{tpu_custom_call.1} parent=1 // pred_fallthru
      _
    %2437 = vsyncpa [#allocation3], 1
    %2438 = vsyncpa [#allocation6], 1
    %2439 = vsyncpa [#allocation4], 1

</llo_original>
